<compile_context>
chip_gen: v7x
topology: tpu7x:2x2x1
jax: 0.10.0
libtpu: 0.0.40
codegen_flags: <defaults>
</compile_context>

<pallas_src>
import functools

import jax
import jax.numpy as jnp
from jax import lax
from jax.experimental import pallas as pl
from jax.experimental.pallas import tpu as pltpu

BN_EPS = 1e-5


def _stats_kernel(p_ref, w_ref, stats_ref):
    """Pass 1: per-channel sum / sum-of-squares of the conv output.

    p_ref     : (1, K, tile_m)  bf16  im2col columns (K = 9*Cin; M on lanes)
    w_ref     : (Cout, K)       bf16  weights, channel-major
    stats_ref : (1, Cout, 2)    f32   lane 0 = sum, lane 1 = sum of squares
                                      (resident accumulator across the spatial axis)
    """
    s = pl.program_id(1)  # spatial (reduction) axis, innermost

    # One MXU matmul covers the whole 3x3 conv for this tile; channels land on
    # sublanes, spatial rows on lanes.
    acc = jnp.dot(w_ref[...], p_ref[0], preferred_element_type=jnp.float32)  # (Cout, tile_m)

    @pl.when(s == 0)
    def _():
        stats_ref[...] = jnp.zeros_like(stats_ref)

    # Single fused accumulator update (lane 0 <- sum, lane 1 <- sumsq).
    # NOTE: single-pass E[x^2]-E[x]^2 in f32; for very large M consider shifted sums.
    s1 = jnp.sum(acc, axis=1, keepdims=True)        # (Cout, 1)
    s2 = jnp.sum(acc * acc, axis=1, keepdims=True)  # (Cout, 1)
    lane = lax.broadcasted_iota(jnp.int32, stats_ref.shape[1:], 1)
    stats_ref[0] += jnp.where(lane == 0, s1, s2)


def _conv_affine_relu_kernel(p_ref, w_ref, ss_ref, o_ref):
    """Pass 2: recompute the conv tile, apply folded BN scale/shift + ReLU.

    p_ref : (1, K, tile_m)    bf16
    w_ref : (Cout, K)         bf16
    ss_ref: (Cout, 2)         f32   lane 0 = scale, lane 1 = shift
    o_ref : (1, Cout, tile_m) f32   NCHW-native output tile (lane-dense spatial axis)
    """
    acc = jnp.dot(w_ref[...], p_ref[0], preferred_element_type=jnp.float32)  # (Cout, tile_m)
    scale = ss_ref[:, 0:1]
    shift = ss_ref[:, 1:2]
    o_ref[0] = jnp.maximum(acc * scale + shift, 0.0)


def _round_up(v, m):
    return (v + m - 1) // m * m


@functools.partial(jax.jit, static_argnames=("tile_m",))
def fuse_block_forward(x, y, w_hwio, bias, gamma, beta, *, tile_m=1024):
    """FuseBlock forward. x, y: NCHW f32. Returns NCHW f32 (N, 256, H, W).

    The conv bias is mathematically a no-op under training-mode BatchNorm (it is
    cancelled by the mean subtraction) and is intentionally not applied.
    """
    del bias  # exactly cancelled by training-mode BN mean subtraction
    n, _, h, w = x.shape
    cin = w_hwio.shape[2]
    cout = w_hwio.shape[3]

    hw = h * w
    kdim = 9 * cin
    tile = max(128, min(tile_m, _round_up(hw, 128)))
    tile = _round_up(tile, 128)            # lane (minor) dim of patches / output blocks
    hw_pad = _round_up(hw, tile)
    s_tiles = hw_pad // tile

    # concat (channels); cast to bf16 BEFORE the 9x-inflated im2col; stay NCHW.
    xc = jnp.concatenate([x, y], axis=1).astype(jnp.bfloat16)     # (N, Cin, H, W)
    xp = jnp.pad(xc, ((0, 0), (0, 0), (1, 1), (1, 1)))            # (N, Cin, H+2, W+2)

    # Channel-major im2col: (N, K=9*Cin, H*W); no K zero-padding (72 = full dim).
    patches = jnp.stack(
        [xp[:, :, dy:dy + h, dx:dx + w] for dy in range(3) for dx in range(3)],
        axis=1)                                                   # (N, 9, Cin, H, W)
    patches = patches.reshape(n, kdim, hw)
    if hw_pad != hw:
        patches = jnp.pad(patches, ((0, 0), (0, 0), (0, hw_pad - hw)))

    # Weights HWIO (3,3,Cin,Cout) -> (Cout, 9*Cin); K order (ky,kx,ci) matches patches.
    w_t = jnp.transpose(w_hwio, (3, 0, 1, 2)).reshape(cout, kdim).astype(jnp.bfloat16)

    grid = (n, s_tiles)
    p_spec = pl.BlockSpec((1, kdim, tile), lambda b, s: (b, 0, s))
    w_spec = pl.BlockSpec((cout, kdim), lambda b, s: (0, 0))

    # Pass 1: per-batch partial per-channel sum/sumsq.  Batch axis is "parallel"
    # (v7x's two TensorCores stream disjoint halves of patches, 1x HBM traffic);
    # the spatial axis is the resident-accumulator reduction.
    stats = pl.pallas_call(
        _stats_kernel,
        out_shape=jax.ShapeDtypeStruct((n, cout, 2), jnp.float32),
        grid_spec=pltpu.PrefetchScalarGridSpec(
            num_scalar_prefetch=0,
            grid=grid,
            in_specs=[p_spec, w_spec],
            out_specs=pl.BlockSpec((1, cout, 2), lambda b, s: (b, 0, 0)),
        ),
        compiler_params=pltpu.CompilerParams(
            dimension_semantics=("parallel", "arbitrary"),
            vmem_limit_bytes=32 * 1024 * 1024),
    )(patches, w_t)

    # Fold training-mode BN into one per-channel scale/shift (tiny (Cout,2) jnp op).
    tot = jnp.sum(stats, axis=0)                       # (Cout, 2)
    inv_count = 1.0 / (n * hw)
    mean = tot[:, 0] * inv_count
    var = tot[:, 1] * inv_count - mean * mean          # biased variance (single-pass)
    scale = gamma * lax.rsqrt(var + BN_EPS)
    shift = beta - mean * scale
    ss = jnp.stack([scale, shift], axis=1).astype(jnp.float32)   # (Cout, 2)

    # Pass 2: recompute the conv tile (MXU slack is free, skips the f32 HBM round-trip),
    # apply scale/shift + ReLU, write NCHW-native (no wrapper transpose afterwards).
    out = pl.pallas_call(
        _conv_affine_relu_kernel,
        out_shape=jax.ShapeDtypeStruct((n, cout, hw_pad), jnp.float32),
        grid_spec=pltpu.PrefetchScalarGridSpec(
            num_scalar_prefetch=0,
            grid=grid,
            in_specs=[p_spec, w_spec, pl.BlockSpec((cout, 2), lambda b, s: (0, 0))],
            out_specs=pl.BlockSpec((1, cout, tile), lambda b, s: (b, 0, s)),
        ),
        compiler_params=pltpu.CompilerParams(
            dimension_semantics=("parallel", "parallel"),
            vmem_limit_bytes=32 * 1024 * 1024),
    )(patches, w_t, ss)

    if hw_pad != hw:
        out = out[:, :, :hw]
    return out.reshape(n, cout, h, w)  # pure reshape; no NCHW transpose needed


def _reference(x, y, w_hwio, bias, gamma, beta):
    """Plain-JAX f32 reference of the PyTorch forward (training-mode BN)."""
    xc = jnp.concatenate([x, y], axis=1)
    w_oihw = jnp.transpose(w_hwio, (3, 2, 0, 1))
    conv = lax.conv_general_dilated(
        xc, w_oihw, window_strides=(1, 1), padding="SAME",
        dimension_numbers=("NCHW", "OIHW", "NCHW"))
    conv = conv + bias[None, :, None, None]
    mean = conv.mean(axis=(0, 2, 3), keepdims=True)
    var = ((conv - mean) ** 2).mean(axis=(0, 2, 3), keepdims=True)
    out = (conv - mean) * lax.rsqrt(var + BN_EPS)
    out = out * gamma[None, :, None, None] + beta[None, :, None, None]
    return jnp.maximum(out, 0.0)


if __name__ == "__main__":
    # Small shapes consistent with the module: FuseBlock(in_channel1=4, in_channel2=4)
    N, C1, C2, H, W = 2, 4, 4, 16, 16
    COUT = 256
    CIN = C1 + C2

    key = jax.random.PRNGKey(0)
    kx, ky, kw = jax.random.split(key, 3)

    x = jax.random.normal(kx, (N, C1, H, W), dtype=jnp.float32)
    y = jax.random.normal(ky, (N, C2, H, W), dtype=jnp.float32)

    # Conv2d weight: kaiming_normal_(fan_in, relu) -> std = sqrt(2 / (Cin*3*3)); bias = 0.
    fan_in = CIN * 3 * 3
    w_hwio = jax.random.normal(kw, (3, 3, CIN, COUT), dtype=jnp.float32) * jnp.sqrt(2.0 / fan_in)
    bias = jnp.zeros((COUT,), jnp.float32)
    # BatchNorm2d: weight = 1, bias = 0.
    gamma = jnp.ones((COUT,), jnp.float32)
    beta = jnp.zeros((COUT,), jnp.float32)

    out = fuse_block_forward(x, y, w_hwio, bias, gamma, beta)
    out = jax.block_until_ready(out)

    ref = _reference(x, y, w_hwio, bias, gamma, beta)
    assert out.shape == (N, COUT, H, W), out.shape
    # bf16 MXU inputs -> tolerance loosened vs the f32 reference.
    assert jnp.allclose(out, ref, atol=2e-2, rtol=2e-2), float(jnp.abs(out - ref).max())

    print("KERNEL_OK")
</pallas_src>

<mosaic_0001>
module attributes {stable_mosaic.version = 11 : i64} {
  func.func @_stats_kernel(%arg0: i32, %arg1: i32, %arg2: memref<1x72x256xbf16, #tpu.memory_space<vmem>>, %arg3: memref<256x72xbf16, #tpu.memory_space<vmem>>, %arg4: memref<1x256x2xf32, #tpu.memory_space<vmem>>) attributes {dimension_semantics = [#tpu.dimension_semantics<parallel>, #tpu.dimension_semantics<arbitrary>], iteration_bounds = array<i64: 2, 1>, scalar_prefetch = 0 : i64, scratch_operands = 0 : i64, tpu.core_type = #tpu.core_type<tc>, window_params = [{transform_indices = @transform_0, window_bounds = array<i64: 1, 72, 256>}, {pipeline_mode = #tpu.pipeline_mode<synchronous>, transform_indices = @transform_1, window_bounds = array<i64: 256, 72>}, {transform_indices = @transform_2, window_bounds = array<i64: 1, 256, 2>}]} {
    %c0 = arith.constant 0 : index
    %c0_0 = arith.constant 0 : index
    %0 = vector.load %arg3[%c0, %c0_0] : memref<256x72xbf16, #tpu.memory_space<vmem>>, vector<256x72xbf16>
    %c0_1 = arith.constant 0 : index
    %c0_2 = arith.constant 0 : index
    %c0_3 = arith.constant 0 : index
    %1 = vector.load %arg2[%c0_1, %c0_2, %c0_3] : memref<1x72x256xbf16, #tpu.memory_space<vmem>>, vector<1x72x256xbf16>
    %2 = vector.shape_cast %1 : vector<1x72x256xbf16> to vector<72x256xbf16>
    %cst = arith.constant dense<0.000000e+00> : vector<256x256xf32>
    %3 = tpu.matmul %0, %2, %cst {dimension_numbers = #tpu.dot_dimension_numbers<[1], [0], [0], [1], [0, 0, 1, 1], [], []>} : vector<256x72xbf16>, vector<72x256xbf16>, vector<256x256xf32> -> vector<256x256xf32>
    %c0_i32 = arith.constant 0 : i32
    %4 = arith.cmpi eq, %arg1, %c0_i32 : i32
    %5 = arith.extui %4 : i1 to i32
    %c0_i32_4 = arith.constant 0 : i32
    %6 = arith.cmpi ne, %5, %c0_i32_4 : i32
    scf.if %6 {
      %cst_14 = arith.constant 0.000000e+00 : f32
      %26 = vector.broadcast %cst_14 : f32 to vector<1x256x2xf32>
      %c0_15 = arith.constant 0 : index
      %c0_16 = arith.constant 0 : index
      %c0_17 = arith.constant 0 : index
      %27 = vector.load %arg4[%c0_15, %c0_16, %c0_17] : memref<1x256x2xf32, #tpu.memory_space<vmem>>, vector<1x256x2xf32>
      tpu.vector_store %arg4[%c0_15, %c0_16, %c0_17], %26 {strides = array<i32>} : memref<1x256x2xf32, #tpu.memory_space<vmem>>, vector<1x256x2xf32>,
    } else {
    }
    %cst_5 = arith.constant dense<0.000000e+00> : vector<256xf32>
    %7 = vector.multi_reduction <add>, %3, %cst_5 [1] : vector<256x256xf32> to vector<256xf32>
    %8 = vector.shape_cast %7 : vector<256xf32> to vector<256x1xf32>
    %9 = arith.mulf %3, %3 : vector<256x256xf32>
    %cst_6 = arith.constant dense<0.000000e+00> : vector<256xf32>
    %10 = vector.multi_reduction <add>, %9, %cst_6 [1] : vector<256x256xf32> to vector<256xf32>
    %11 = vector.shape_cast %10 : vector<256xf32> to vector<256x1xf32>
    %12 = tpu.iota {dimensions = array<i32: 1>} : vector<256x2xi32>
    %c0_7 = arith.constant 0 : index
    %c0_8 = arith.constant 0 : index
    %c0_9 = arith.constant 0 : index
    %13 = vector.load %arg4[%c0_7, %c0_8, %c0_9] : memref<1x256x2xf32, #tpu.memory_space<vmem>>, vector<1x256x2xf32>
    %14 = vector.shape_cast %13 : vector<1x256x2xf32> to vector<256x2xf32>
    %c0_i32_10 = arith.constant 0 : i32
    %15 = vector.broadcast %c0_i32_10 : i32 to vector<256x2xi32>
    %16 = arith.cmpi eq, %12, %15 : vector<256x2xi32>
    %17 = vector.shape_cast %8 : vector<256x1xf32> to vector<256x1xf32>
    %18 = vector.broadcast %17 : vector<256x1xf32> to vector<256x2xf32>
    %19 = vector.shape_cast %11 : vector<256x1xf32> to vector<256x1xf32>
    %20 = vector.broadcast %19 : vector<256x1xf32> to vector<256x2xf32>
    %21 = arith.select %16, %18, %20 : vector<256x2xi1>, vector<256x2xf32>
    %22 = arith.addf %14, %21 : vector<256x2xf32>
    %c0_11 = arith.constant 0 : index
    %c0_12 = arith.constant 0 : index
    %c0_13 = arith.constant 0 : index
    %23 = vector.load %arg4[%c0_11, %c0_12, %c0_13] : memref<1x256x2xf32, #tpu.memory_space<vmem>>, vector<1x256x2xf32>
    %24 = vector.shape_cast %23 : vector<1x256x2xf32> to vector<256x2xf32>
    %25 = vector.shape_cast %22 : vector<256x2xf32> to vector<1x256x2xf32>
    tpu.vector_store %arg4[%c0_11, %c0_12, %c0_13], %25 {strides = array<i32>} : memref<1x256x2xf32, #tpu.memory_space<vmem>>, vector<1x256x2xf32>,
    return
  }
  func.func @transform_0(%arg0: i32, %arg1: i32) -> (i32, i32, i32) {
    %c0_i32 = arith.constant 0 : i32
    %c0_i32_0 = arith.constant 0 : i32
    return %arg0, %c0_i32, %arg1 : i32, i32, i32
  }
  func.func @transform_1(%arg0: i32, %arg1: i32) -> (i32, i32) {
    %c0_i32 = arith.constant 0 : i32
    %c0_i32_0 = arith.constant 0 : i32
    %c0_i32_1 = arith.constant 0 : i32
    return %c0_i32, %c0_i32_0 : i32, i32
  }
  func.func @transform_2(%arg0: i32, %arg1: i32) -> (i32, i32, i32) {
    %c0_i32 = arith.constant 0 : i32
    %c0_i32_0 = arith.constant 0 : i32
    %c0_i32_1 = arith.constant 0 : i32
    return %arg0, %c0_i32, %c0_i32_0 : i32, i32, i32
  }
}

module attributes {stable_mosaic.version = 11 : i64} {
  func.func @_conv_affine_relu_kernel(%arg0: i32, %arg1: i32, %arg2: memref<1x72x256xbf16, #tpu.memory_space<vmem>>, %arg3: memref<256x72xbf16, #tpu.memory_space<vmem>>, %arg4: memref<256x2xf32, #tpu.memory_space<vmem>>, %arg5: memref<1x256x256xf32, #tpu.memory_space<vmem>>) attributes {dimension_semantics = [#tpu.dimension_semantics<parallel>, #tpu.dimension_semantics<parallel>], iteration_bounds = array<i64: 2, 1>, scalar_prefetch = 0 : i64, scratch_operands = 0 : i64, tpu.core_type = #tpu.core_type<tc>, window_params = [{transform_indices = @transform_0, window_bounds = array<i64: 1, 72, 256>}, {pipeline_mode = #tpu.pipeline_mode<synchronous>, transform_indices = @transform_1, window_bounds = array<i64: 256, 72>}, {pipeline_mode = #tpu.pipeline_mode<synchronous>, transform_indices = @transform_2, window_bounds = array<i64: 256, 2>}, {transform_indices = @transform_3, window_bounds = array<i64: 1, 256, 256>}]} {
    %c0 = arith.constant 0 : index
    %c0_0 = arith.constant 0 : index
    %0 = vector.load %arg3[%c0, %c0_0] : memref<256x72xbf16, #tpu.memory_space<vmem>>, vector<256x72xbf16>
    %c0_1 = arith.constant 0 : index
    %c0_2 = arith.constant 0 : index
    %c0_3 = arith.constant 0 : index
    %1 = vector.load %arg2[%c0_1, %c0_2, %c0_3] : memref<1x72x256xbf16, #tpu.memory_space<vmem>>, vector<1x72x256xbf16>
    %2 = vector.shape_cast %1 : vector<1x72x256xbf16> to vector<72x256xbf16>
    %cst = arith.constant dense<0.000000e+00> : vector<256x256xf32>
    %3 = tpu.matmul %0, %2, %cst {dimension_numbers = #tpu.dot_dimension_numbers<[1], [0], [0], [1], [0, 0, 1, 1], [], []>} : vector<256x72xbf16>, vector<72x256xbf16>, vector<256x256xf32> -> vector<256x256xf32>
    %c0_4 = arith.constant 0 : index
    %c0_5 = arith.constant 0 : index
    %4 = vector.load %arg4[%c0_4, %c0_5] : memref<256x2xf32, #tpu.memory_space<vmem>>, vector<256x1xf32>
    %c0_6 = arith.constant 0 : index
    %c1 = arith.constant 1 : index
    %5 = vector.load %arg4[%c0_6, %c1] : memref<256x2xf32, #tpu.memory_space<vmem>>, vector<256x1xf32>
    %6 = vector.broadcast %4 : vector<256x1xf32> to vector<256x256xf32>
    %7 = arith.mulf %3, %6 : vector<256x256xf32>
    %8 = vector.broadcast %5 : vector<256x1xf32> to vector<256x256xf32>
    %9 = arith.addf %7, %8 : vector<256x256xf32>
    %cst_7 = arith.constant 0.000000e+00 : f32
    %10 = vector.broadcast %cst_7 : f32 to vector<256x256xf32>
    %11 = arith.maximumf %9, %10 : vector<256x256xf32>
    %c0_8 = arith.constant 0 : index
    %c0_9 = arith.constant 0 : index
    %c0_10 = arith.constant 0 : index
    %12 = vector.load %arg5[%c0_8, %c0_9, %c0_10] : memref<1x256x256xf32, #tpu.memory_space<vmem>>, vector<1x256x256xf32>
    %13 = vector.shape_cast %12 : vector<1x256x256xf32> to vector<256x256xf32>
    %14 = vector.shape_cast %11 : vector<256x256xf32> to vector<1x256x256xf32>
    tpu.vector_store %arg5[%c0_8, %c0_9, %c0_10], %14 {strides = array<i32>} : memref<1x256x256xf32, #tpu.memory_space<vmem>>, vector<1x256x256xf32>,
    return
  }
  func.func @transform_0(%arg0: i32, %arg1: i32) -> (i32, i32, i32) {
    %c0_i32 = arith.constant 0 : i32
    %c0_i32_0 = arith.constant 0 : i32
    return %arg0, %c0_i32, %arg1 : i32, i32, i32
  }
  func.func @transform_1(%arg0: i32, %arg1: i32) -> (i32, i32) {
    %c0_i32 = arith.constant 0 : i32
    %c0_i32_0 = arith.constant 0 : i32
    %c0_i32_1 = arith.constant 0 : i32
    return %c0_i32, %c0_i32_0 : i32, i32
  }
  func.func @transform_2(%arg0: i32, %arg1: i32) -> (i32, i32) {
    %c0_i32 = arith.constant 0 : i32
    %c0_i32_0 = arith.constant 0 : i32
    %c0_i32_1 = arith.constant 0 : i32
    return %c0_i32, %c0_i32_0 : i32, i32
  }
  func.func @transform_3(%arg0: i32, %arg1: i32) -> (i32, i32, i32) {
    %c0_i32 = arith.constant 0 : i32
    %c0_i32_0 = arith.constant 0 : i32
    return %arg0, %c0_i32, %arg1 : i32, i32, i32
  }
}

</mosaic_0001>

<llo_original>
// kernel: fuse_block_forward.2
$region0: #{fuse_block_forward.2}
  #allocation0 [shape = 'u32[]', space=smem, size = 0x4, offset = 0x4, fixed_abs, tag = 'smem constant byte address 0x4 - core index']
  #allocation1 [shape = 'u32[144,128]{1,0:T(1,128)}', space=vmem, size = 0x12000, scoped, tag = 'internal scratch']
  %s0 = inlined_call_operand.vmem [shape: bf16[2,72,256], index: 0, kind: input, shape index: {}]
  %s1 = inlined_call_operand.vmem [shape: bf16[256,72], index: 1, kind: input, shape index: {}]
  %s2 = inlined_call_operand.vmem [shape: f32[2,256,2], index: 2, kind: output, shape index: {}]
  %s3 = sld [smem:[#allocation0]]
  $region45: #{fuse_block_forward.2} parent=0
    _
  %s5 = ssub.s32 1, %s3
  %s6 = scalar_select 0, %s5, %s3
  loop: start=0, step=1, limit=4
  $region2: #{fuse_block_forward.2} parent=0 // loop_pre_header
    _
  $region3: #{fuse_block_forward.2} parent=0 // loop_header
    %s8 = sphi 0, %s12
    %p9 = scmp.ge.s32.totalorder %s8, 4
    %s15 = sphi 0, %s27
    %s16 = sphi 0, %s23
    %s17 = sphi 0, %s15
    %s18 = sphi 0, %s16
    %s19 = sphi 0, %s17
    %s20 = sphi 0, %s18
    %s32 = sphi 0, %s34
    %s35 = sphi 0, %s32
    %s36 = sphi 0, %s35
    %s52 = sphi 0, %s36
    %s56 = sphi 0, %s56
    %s58 = sphi 0, %s56
    %s59 = sphi 0, %s58
    %s73 = sphi 0, %s59
    %s79 = sphi 0, %s81
    %s82 = sphi 0, %s79
    %s83 = sphi 0, %s82
    %s99 = sphi 0, %s83
  $region4: #{fuse_block_forward.2} parent=0 // loop_header_branch
    %11 = sbr.rel (%p9) target = $region8
  $region5: #{fuse_block_forward.2} parent=0 // loop_body
    %s13 = ssub.s32 %s8, 1
    %s14 = ssub.s32 %s8, 2
    %s21 = sadd.s32 1, %s16
    %p22 = scmp.ge.s32.totalorder %s21, 1
    %s23 = scalar_select %p22, 0, %s21
    %s24 = sadd.s32 1, %s15
    %s25 = scalar_select %p22, %s24, %s15
    %p26 = scmp.ge.s32.totalorder %s25, 2
    %s27 = scalar_select %p26, 0, %s25
    %s28 = ssub.s32 %s15, %s27
    %s29 = ssub.s32 %s16, %s23
    %s30 = sor.u32 %s28, %s29
    %p31 = scmp.eq.s32.totalorder %s30, 0
    %s33 = sadd.s32 %s32, 1
    %s34 = scalar_select %p31, %s32, %s33
    %p37 = pneg %p31
    %p38 = scmp.eq.s32.totalorder %s8, 1
    %p39 = por %p37, %p38
    %p40 = scmp.ne.s32.totalorder %s32, %s35
    %p41 = scmp.eq.s32.totalorder %s8, 0
    %p42 = por %p40, %p41
    %p43 = scmp.ne.s32.totalorder %s32, %s35
    %p44 = scmp.eq.s32.totalorder %s13, 1
    %p45 = por %p43, %p44
    %p46 = scmp.ne.s32.totalorder %s35, %s36
    %p47 = scmp.eq.s32.totalorder %s13, 0
    %p48 = por %p46, %p47
    %p49 = scmp.ne.s32.totalorder %s35, %s36
    %p50 = scmp.eq.s32.totalorder %s14, 1
    %p51 = por %p49, %p50
    %p53 = scmp.ne.s32.totalorder %s36, %s52
    %p54 = scmp.eq.s32.totalorder %s14, 0
    %p55 = por %p53, %p54
    %s57 = sadd.s32 %s56, 1
    %p60 = scmp.eq.s32.totalorder %s8, 1
    %p61 = scmp.ne.s32.totalorder %s56, %s58
    %p62 = scmp.eq.s32.totalorder %s8, 0
    %p63 = por %p61, %p62
    %p64 = scmp.ne.s32.totalorder %s56, %s58
    %p65 = scmp.eq.s32.totalorder %s13, 1
    %p66 = por %p64, %p65
    %p67 = scmp.ne.s32.totalorder %s58, %s59
    %p68 = scmp.eq.s32.totalorder %s13, 0
    %p69 = por %p67, %p68
    %p70 = scmp.ne.s32.totalorder %s58, %s59
    %p71 = scmp.eq.s32.totalorder %s14, 1
    %p72 = por %p70, %p71
    %p74 = scmp.ne.s32.totalorder %s59, %s73
    %p75 = scmp.eq.s32.totalorder %s14, 0
    %p76 = por %p74, %p75
    %s77 = ssub.s32 %s15, %s27
    %p78 = scmp.eq.s32.totalorder %s77, 0
    %s80 = sadd.s32 %s79, 1
    %s81 = scalar_select %p78, %s79, %s80
    %p84 = pneg %p78
    %p85 = scmp.eq.s32.totalorder %s8, 1
    %p86 = por %p84, %p85
    %p87 = scmp.ne.s32.totalorder %s79, %s82
    %p88 = scmp.eq.s32.totalorder %s8, 0
    %p89 = por %p87, %p88
    %p90 = scmp.ne.s32.totalorder %s79, %s82
    %p91 = scmp.eq.s32.totalorder %s13, 1
    %p92 = por %p90, %p91
    %p93 = scmp.ne.s32.totalorder %s82, %s83
    %p94 = scmp.eq.s32.totalorder %s13, 0
    %p95 = por %p93, %p94
    %p96 = scmp.ne.s32.totalorder %s82, %s83
    %p97 = scmp.eq.s32.totalorder %s14, 1
    %p98 = por %p96, %p97
    %p100 = scmp.ne.s32.totalorder %s83, %s99
    %p101 = scmp.eq.s32.totalorder %s14, 0
    %p102 = por %p100, %p101
    %p103 = scmp.le.s32.totalorder 1, %s8
    %p104 = scmp.lt.s32.totalorder %s8, 3
    %p105 = pnand %p103, %p104
    %p106 = pneg %p105
    // Predicated region
    $region9: #{fuse_block_forward.2} parent=5 // pred_check
      _
    $region10: #{fuse_block_forward.2} parent=5 // pred_check_branch
      %108 = sbr.rel (%p105) target = $region12
    $region11: #{fuse_block_forward.2} parent=5 // pred_region
      %s109 = ssub.s32 %s8, 1
      // Predicated region
      $region13: #{fuse_block_forward.2} parent=11 // pred_check
        %p110 = pneg %p69
      $region14: #{fuse_block_forward.2} parent=11 // pred_check_branch
        %112 = sbr.rel (%p110) target = $region16
      $region15: #{fuse_block_forward.2} parent=11 // pred_region
        _
      $region16: #{fuse_block_forward.2} parent=11 // pred_fallthru
        _
    $region12: #{fuse_block_forward.2} parent=5 // pred_fallthru
      _
    %p113 = scmp.lt.s32.totalorder %s8, 2
    // Predicated region
    $region17: #{fuse_block_forward.2} parent=5 // pred_check
      %p114 = pneg %p113
    $region18: #{fuse_block_forward.2} parent=5 // pred_check_branch
      %116 = sbr.rel (%p114) target = $region20
    $region19: #{fuse_block_forward.2} parent=5 // pred_region
      // Predicated region
      $region21: #{fuse_block_forward.2} parent=19 // pred_check
        %p117 = pneg %p42
      $region22: #{fuse_block_forward.2} parent=19 // pred_check_branch
        %119 = sbr.rel (%p117) target = $region24
      $region23: #{fuse_block_forward.2} parent=19 // pred_region
        %s120 = smul.u32 2, %s16
        %p121 = scmp.lt.s32.totalorder %s15, 1
        %s122 = scalar_select %p121, %s15, 1
        %p123 = scmp.lt.s32.totalorder %s120, 1
        %s124 = scalar_select %p123, %s120, 1
        %s125 = smul.addr %s122, 18
        %s126 = sadd.s32 %s124, %s125
        %s127 = smul.addr %s126, 4
        %s128 = scalar_lea.vmem %s0, %s127
        %s129 = smul.u32 2, %s16
      $region24: #{fuse_block_forward.2} parent=19 // pred_fallthru
        _
    $region20: #{fuse_block_forward.2} parent=5 // pred_fallthru
      _
    %p130 = scmp.le.s32.totalorder 1, %s8
    %p131 = scmp.lt.s32.totalorder %s8, 3
    %p132 = pnand %p130, %p131
    %p133 = pneg %p132
    // Predicated region
    $region25: #{fuse_block_forward.2} parent=5 // pred_check
      _
    $region26: #{fuse_block_forward.2} parent=5 // pred_check_branch
      %135 = sbr.rel (%p132) target = $region28
    $region27: #{fuse_block_forward.2} parent=5 // pred_region
      %s136 = ssub.s32 %s8, 1
      %s137 = smul.u32 2, %s18
      %p138 = scmp.lt.s32.totalorder %s17, 1
      %s139 = scalar_select %p138, %s17, 1
      %p140 = scmp.lt.s32.totalorder %s137, 1
      %s141 = scalar_select %p140, %s137, 1
      %s142 = smul.addr %s139, 18
      %s143 = sadd.s32 %s141, %s142
      %s144 = smul.addr %s143, 4
      %s145 = scalar_lea.vmem %s0, %s144
      %p146 = pneg %p48
      %p147 = pneg %p45
      %p148 = pneg %p69
      %p149 = pneg %p66
      %p150 = pneg %p95
      %p151 = pneg %p92
      %p152 = scmp.lt.s32.totalorder %s17, 1
      %s153 = scalar_select %p152, %s17, 1
      %s154 = smul.addr %s153, 32
      %s155 = smul.addr %s154, 8
      %s156 = scalar_lea.vmem %s2, %s155
      %s157 = smul.u32 2, %s18
      %p158 = scmp.lt.s32.totalorder %s17, 1
      %s159 = scalar_select %p158, %s17, 1
      %p160 = scmp.lt.s32.totalorder %s157, 1
      %s161 = scalar_select %p160, %s157, 1
      %s162 = smul.addr %s159, 18
      %s163 = sadd.s32 %s161, %s162
      %s164 = smul.addr %s163, 4
      %s165 = scalar_lea.vmem %s0, %s164
      %s166 = smul.u32 2, %s18
      %p167 = scmp.lt.s32.totalorder %s17, 1
      %s168 = scalar_select %p167, %s17, 1
      %s169 = smul.addr %s168, 32
      %s170 = smul.addr %s169, 8
      %s171 = scalar_lea.vmem %s2, %s170
      %v173 = vld [vmem:[%s1] sm:$0xf]
      %v174 = vld [vmem:[%s1 + $0x4] sm:$0xf]
      %v175 = vld [vmem:[%s1 + $0x8] sm:$0xf]
      %v176 = vld [vmem:[%s1 + $0xc] sm:$0xf]
      %v177 = vld [vmem:[%s1 + $0x10] sm:$0xf]
      %v178 = vld [vmem:[%s1 + $0x14] sm:$0xf]
      %v179 = vld [vmem:[%s1 + $0x18] sm:$0xf]
      %v180 = vld [vmem:[%s1 + $0x1c] sm:$0xf]
      %v181 = vld [vmem:[%s1 + $0x20] sm:$0xf]
      %v182 = vld [vmem:[%s1 + $0x24] sm:$0xf]
      %v183 = vld [vmem:[%s1 + $0x28] sm:$0xf]
      %v184 = vld [vmem:[%s1 + $0x2c] sm:$0xf]
      %v185 = vld [vmem:[%s1 + $0x30] sm:$0xf]
      %v186 = vld [vmem:[%s1 + $0x34] sm:$0xf]
      %v187 = vld [vmem:[%s1 + $0x38] sm:$0xf]
      %v188 = vld [vmem:[%s1 + $0x3c] sm:$0xf]
      %v189 = vld [vmem:[%s1 + $0x40] sm:$0xf]
      %v190 = vld [vmem:[%s1 + $0x44] sm:$0xf]
      %v191 = vld [vmem:[%s1 + $0x48] sm:$0xf]
      %v192 = vld [vmem:[%s1 + $0x4c] sm:$0xf]
      %v193 = vld [vmem:[%s1 + $0x50] sm:$0xf]
      %v194 = vld [vmem:[%s1 + $0x54] sm:$0xf]
      %v195 = vld [vmem:[%s1 + $0x58] sm:$0xf]
      %v196 = vld [vmem:[%s1 + $0x5c] sm:$0xf]
      %v197 = vld [vmem:[%s1 + $0x60] sm:$0xf]
      %v198 = vld [vmem:[%s1 + $0x64] sm:$0xf]
      %v199 = vld [vmem:[%s1 + $0x68] sm:$0xf]
      %v200 = vld [vmem:[%s1 + $0x6c] sm:$0xf]
      %v201 = vld [vmem:[%s1 + $0x70] sm:$0xf]
      %v202 = vld [vmem:[%s1 + $0x74] sm:$0xf]
      %v203 = vld [vmem:[%s1 + $0x78] sm:$0xf]
      %v204 = vld [vmem:[%s1 + $0x7c] sm:$0xf]
      %v205 = vld [vmem:[%s165] sm:$0xff]
      %v206 = vld [vmem:[%s165 + $0x8] sm:$0xff]
      %v207 = vld [vmem:[%s165 + $0x10] sm:$0xff]
      %v208 = vld [vmem:[%s165 + $0x18] sm:$0xff]
      %v209 = vld [vmem:[%s165 + $0x20] sm:$0xff]
      %v210 = vld [vmem:[%s165 + $0x28] sm:$0xff]
      %v211 = vld [vmem:[%s165 + $0x30] sm:$0xff]
      %v212 = vld [vmem:[%s165 + $0x38] sm:$0xff]
      %v213 = vld [vmem:[%s165 + $0x40] sm:$0xff]
      %v246 = vunpack.c.l.b16 %v173
      %v247 = vunpack.c.l.b16 %v174
      %v248 = vunpack.c.l.b16 %v175
      %v249 = vunpack.c.l.b16 %v176
      %v250 = vunpack.c.l.b16 %v177
      %v251 = vunpack.c.l.b16 %v178
      %v252 = vunpack.c.l.b16 %v179
      %v253 = vunpack.c.l.b16 %v180
      %v254 = vunpack.c.l.b16 %v181
      %v255 = vunpack.c.l.b16 %v182
      %v256 = vunpack.c.l.b16 %v183
      %v257 = vunpack.c.l.b16 %v184
      %v258 = vunpack.c.l.b16 %v185
      %v259 = vunpack.c.l.b16 %v186
      %v260 = vunpack.c.l.b16 %v187
      %v261 = vunpack.c.l.b16 %v188
      %v262 = vunpack.c.l.b16 %v189
      %v263 = vunpack.c.l.b16 %v190
      %v264 = vunpack.c.l.b16 %v191
      %v265 = vunpack.c.l.b16 %v192
      %v266 = vunpack.c.l.b16 %v193
      %v267 = vunpack.c.l.b16 %v194
      %v268 = vunpack.c.l.b16 %v195
      %v269 = vunpack.c.l.b16 %v196
      %v270 = vunpack.c.l.b16 %v197
      %v271 = vunpack.c.l.b16 %v198
      %v272 = vunpack.c.l.b16 %v199
      %v273 = vunpack.c.l.b16 %v200
      %v274 = vunpack.c.l.b16 %v201
      %v275 = vunpack.c.l.b16 %v202
      %v276 = vunpack.c.l.b16 %v203
      %v277 = vunpack.c.l.b16 %v204
      %v278 = vpack.c.b16 %v247, %v246
      %v279 = vpack.c.b16 %v249, %v248
      %v280 = vpack.c.b16 %v251, %v250
      %v281 = vpack.c.b16 %v253, %v252
      %v282 = vpack.c.b16 %v255, %v254
      %v283 = vpack.c.b16 %v257, %v256
      %v284 = vpack.c.b16 %v259, %v258
      %v285 = vpack.c.b16 %v261, %v260
      %v286 = vpack.c.b16 %v263, %v262
      %v287 = vpack.c.b16 %v265, %v264
      %v288 = vpack.c.b16 %v267, %v266
      %v289 = vpack.c.b16 %v269, %v268
      %v290 = vpack.c.b16 %v271, %v270
      %v291 = vpack.c.b16 %v273, %v272
      %v292 = vpack.c.b16 %v275, %v274
      %v293 = vpack.c.b16 %v277, %v276
      %v303 = vunpack.c.l.b16 %v205
      %v304 = vunpack.c.h.b16 %v205
      %v305 = vunpack.c.l.b16 %v206
      %v306 = vunpack.c.h.b16 %v206
      %v307 = vunpack.c.l.b16 %v207
      %v308 = vunpack.c.h.b16 %v207
      %v309 = vunpack.c.l.b16 %v208
      %v310 = vunpack.c.h.b16 %v208
      %v311 = vunpack.c.l.b16 %v209
      %v312 = vunpack.c.h.b16 %v209
      %v313 = vunpack.c.l.b16 %v210
      %v314 = vunpack.c.h.b16 %v210
      %v315 = vunpack.c.l.b16 %v211
      %v316 = vunpack.c.h.b16 %v211
      %v317 = vunpack.c.l.b16 %v212
      %v318 = vunpack.c.h.b16 %v212
      %v319 = vunpack.c.l.b16 %v213
      %v320 = vunpack.c.h.b16 %v213
      %v321 = vpack.c.b16 %v305, %v303
      %v322 = vpack.c.b16 %v306, %v304
      %v323 = vpack.c.b16 %v309, %v307
      %v324 = vpack.c.b16 %v310, %v308
      %v325 = vpack.c.b16 %v313, %v311
      %v326 = vpack.c.b16 %v314, %v312
      %v327 = vpack.c.b16 %v317, %v315
      %v328 = vpack.c.b16 %v318, %v316
      %v329 = vpack.c.b16 %v319, %v319
      %v330 = vpack.c.b16 %v320, %v320
      %vm339 = vcmask 588800
      %v341 = vsel %vm339, %v278, 0
      %v344 = vsel %vm339, %v279, 0
      %v347 = vsel %vm339, %v280, 0
      %v350 = vsel %vm339, %v281, 0
      %v353 = vsel %vm339, %v282, 0
      %v356 = vsel %vm339, %v283, 0
      %v359 = vsel %vm339, %v284, 0
      %v362 = vsel %vm339, %v285, 0
      %v365 = vsel %vm339, %v286, 0
      %v368 = vsel %vm339, %v287, 0
      %v371 = vsel %vm339, %v288, 0
      %v374 = vsel %vm339, %v289, 0
      %v377 = vsel %vm339, %v290, 0
      %v380 = vsel %vm339, %v291, 0
      %v383 = vsel %vm339, %v292, 0
      %v386 = vsel %vm339, %v293, 0
      %vm388 = vcmask 1043456
      %v390 = vsel %vm388, %v329, 0
      %v393 = vsel %vm388, %v330, 0
      %395 = vmatprep.subr.bf16.mxu0 %v322
      %396 = vmatpush1.bf16.msra.mxu0 %v321
      %397 = vmatprep.subr.bf16.mxu0 %v324
      %398 = vmatpush1.bf16.msra.mxu0 %v323
      %399 = vmatprep.subr.bf16.mxu0 %v326
      %400 = vmatpush1.bf16.msra.mxu0 %v325
      %401 = vmatprep.subr.bf16.mxu0 %v328
      %402 = vmatpush1.bf16.msra.mxu0 %v327
      %403 = vmatprep.subr.bf16.mxu0 %v393
      %404 = vmatpush1.bf16.msra.mxu0 %v390
      %405 = vmatprep.subr.bf16.mxu0 0
      %406 = vmatpush1.bf16.msra.mxu0 0
      %407 = vmatprep.subr.bf16.mxu0 0
      %408 = vmatpush1.bf16.msra.mxu0 0
      %409 = vmatprep.subr.bf16.mxu0 0
      %410 = vmatpush1.bf16.msra.mxu0 0
      %411 = vmatprep.subr.bf16.mxu0 0
      %412 = vmatpush1.bf16.msra.mxu0 0
      %413 = vmatprep.subr.bf16.mxu0 0
      %414 = vmatpush1.bf16.msra.mxu0 0
      %415 = vmatprep.subr.bf16.mxu0 0
      %416 = vmatpush1.bf16.msra.mxu0 0
      %417 = vmatprep.subr.bf16.mxu0 0
      %418 = vmatpush1.bf16.msra.mxu0 0
      %419 = vmatprep.subr.bf16.mxu0 0
      %420 = vmatpush1.bf16.msra.mxu0 0
      %421 = vmatprep.subr.bf16.mxu0 0
      %422 = vmatpush1.bf16.msra.mxu0 0
      %423 = vmatprep.subr.bf16.mxu0 0
      %424 = vmatpush1.bf16.msra.mxu0 0
      %425 = vmatprep.subr.bf16.mxu0 0
      %426 = vmatpush1.bf16.msra.mxu0 0
      %427 = vmatprep.mubr.bf16.mxu0 0
      %428 = vmatmul.mubr.bf16.gmra.mrb[0].mxu0 %v341
      %v429 = vpop.f32.mrb[0].mxu0
      %v430 = vadd.f32 0.0, %v429
      %v431 = vpop.f32.mrb[0].mxu0
      %v432 = vadd.f32 0.0, %v431
      %v433 = vpop.f32.mrb[0].mxu0
      %v434 = vadd.f32 0.0, %v433
      %v435 = vpop.f32.mrb[0].mxu0
      %v436 = vadd.f32 0.0, %v435
      %437 = vmatprep.mubr.bf16.mxu0 0
      %438 = vmatmul.mubr.bf16.gmra.mrb[0].mxu0 %v344
      %v439 = vpop.f32.mrb[0].mxu0
      %v440 = vadd.f32 0.0, %v439
      %v441 = vpop.f32.mrb[0].mxu0
      %v442 = vadd.f32 0.0, %v441
      %v443 = vpop.f32.mrb[0].mxu0
      %v444 = vadd.f32 0.0, %v443
      %v445 = vpop.f32.mrb[0].mxu0
      %v446 = vadd.f32 0.0, %v445
      %447 = vmatprep.mubr.bf16.mxu0 0
      %448 = vmatmul.mubr.bf16.gmra.mrb[0].mxu0 %v347
      %v449 = vpop.f32.mrb[0].mxu0
      %v450 = vadd.f32 0.0, %v449
      %v451 = vpop.f32.mrb[0].mxu0
      %v452 = vadd.f32 0.0, %v451
      %v453 = vpop.f32.mrb[0].mxu0
      %v454 = vadd.f32 0.0, %v453
      %v455 = vpop.f32.mrb[0].mxu0
      %v456 = vadd.f32 0.0, %v455
      %457 = vmatprep.mubr.bf16.mxu0 0
      %458 = vmatmul.mubr.bf16.gmra.mrb[0].mxu0 %v350
      %v459 = vpop.f32.mrb[0].mxu0
      %v460 = vadd.f32 0.0, %v459
      %v461 = vpop.f32.mrb[0].mxu0
      %v462 = vadd.f32 0.0, %v461
      %v463 = vpop.f32.mrb[0].mxu0
      %v464 = vadd.f32 0.0, %v463
      %v465 = vpop.f32.mrb[0].mxu0
      %v466 = vadd.f32 0.0, %v465
      %467 = vmatprep.mubr.bf16.mxu0 0
      %468 = vmatmul.mubr.bf16.gmra.mrb[0].mxu0 %v353
      %v469 = vpop.f32.mrb[0].mxu0
      %v470 = vadd.f32 0.0, %v469
      %v471 = vpop.f32.mrb[0].mxu0
      %v472 = vadd.f32 0.0, %v471
      %v473 = vpop.f32.mrb[0].mxu0
      %v474 = vadd.f32 0.0, %v473
      %v475 = vpop.f32.mrb[0].mxu0
      %v476 = vadd.f32 0.0, %v475
      %477 = vmatprep.mubr.bf16.mxu0 0
      %478 = vmatmul.mubr.bf16.gmra.mrb[0].mxu0 %v356
      %v479 = vpop.f32.mrb[0].mxu0
      %v480 = vadd.f32 0.0, %v479
      %v481 = vpop.f32.mrb[0].mxu0
      %v482 = vadd.f32 0.0, %v481
      %v483 = vpop.f32.mrb[0].mxu0
      %v484 = vadd.f32 0.0, %v483
      %v485 = vpop.f32.mrb[0].mxu0
      %v486 = vadd.f32 0.0, %v485
      %487 = vmatprep.mubr.bf16.mxu0 0
      %488 = vmatmul.mubr.bf16.gmra.mrb[0].mxu0 %v359
      %v489 = vpop.f32.mrb[0].mxu0
      %v490 = vadd.f32 0.0, %v489
      %v491 = vpop.f32.mrb[0].mxu0
      %v492 = vadd.f32 0.0, %v491
      %v493 = vpop.f32.mrb[0].mxu0
      %v494 = vadd.f32 0.0, %v493
      %v495 = vpop.f32.mrb[0].mxu0
      %v496 = vadd.f32 0.0, %v495
      %497 = vmatprep.mubr.bf16.mxu0 0
      %498 = vmatmul.mubr.bf16.gmra.mrb[0].mxu0 %v362
      %v499 = vpop.f32.mrb[0].mxu0
      %v500 = vadd.f32 0.0, %v499
      %v501 = vpop.f32.mrb[0].mxu0
      %v502 = vadd.f32 0.0, %v501
      %v503 = vpop.f32.mrb[0].mxu0
      %v504 = vadd.f32 0.0, %v503
      %v505 = vpop.f32.mrb[0].mxu0
      %v506 = vadd.f32 0.0, %v505
      %507 = vmatprep.mubr.bf16.mxu0 0
      %508 = vmatmul.mubr.bf16.gmra.mrb[0].mxu0 %v365
      %v509 = vpop.f32.mrb[0].mxu0
      %v510 = vadd.f32 0.0, %v509
      %v511 = vpop.f32.mrb[0].mxu0
      %v512 = vadd.f32 0.0, %v511
      %v513 = vpop.f32.mrb[0].mxu0
      %v514 = vadd.f32 0.0, %v513
      %v515 = vpop.f32.mrb[0].mxu0
      %v516 = vadd.f32 0.0, %v515
      %517 = vmatprep.mubr.bf16.mxu0 0
      %518 = vmatmul.mubr.bf16.gmra.mrb[0].mxu0 %v368
      %v519 = vpop.f32.mrb[0].mxu0
      %v520 = vadd.f32 0.0, %v519
      %v521 = vpop.f32.mrb[0].mxu0
      %v522 = vadd.f32 0.0, %v521
      %v523 = vpop.f32.mrb[0].mxu0
      %v524 = vadd.f32 0.0, %v523
      %v525 = vpop.f32.mrb[0].mxu0
      %v526 = vadd.f32 0.0, %v525
      %527 = vmatprep.mubr.bf16.mxu0 0
      %528 = vmatmul.mubr.bf16.gmra.mrb[0].mxu0 %v371
      %v529 = vpop.f32.mrb[0].mxu0
      %v530 = vadd.f32 0.0, %v529
      %v531 = vpop.f32.mrb[0].mxu0
      %v532 = vadd.f32 0.0, %v531
      %v533 = vpop.f32.mrb[0].mxu0
      %v534 = vadd.f32 0.0, %v533
      %v535 = vpop.f32.mrb[0].mxu0
      %v536 = vadd.f32 0.0, %v535
      %537 = vmatprep.mubr.bf16.mxu0 0
      %538 = vmatmul.mubr.bf16.gmra.mrb[0].mxu0 %v374
      %v539 = vpop.f32.mrb[0].mxu0
      %v540 = vadd.f32 0.0, %v539
      %v541 = vpop.f32.mrb[0].mxu0
      %v542 = vadd.f32 0.0, %v541
      %v543 = vpop.f32.mrb[0].mxu0
      %v544 = vadd.f32 0.0, %v543
      %v545 = vpop.f32.mrb[0].mxu0
      %v546 = vadd.f32 0.0, %v545
      %547 = vmatprep.mubr.bf16.mxu0 0
      %548 = vmatmul.mubr.bf16.gmra.mrb[0].mxu0 %v377
      %v549 = vpop.f32.mrb[0].mxu0
      %v550 = vadd.f32 0.0, %v549
      %v551 = vpop.f32.mrb[0].mxu0
      %v552 = vadd.f32 0.0, %v551
      %v553 = vpop.f32.mrb[0].mxu0
      %v554 = vadd.f32 0.0, %v553
      %v555 = vpop.f32.mrb[0].mxu0
      %v556 = vadd.f32 0.0, %v555
      %557 = vmatprep.mubr.bf16.mxu0 0
      %558 = vmatmul.mubr.bf16.gmra.mrb[0].mxu0 %v380
      %v559 = vpop.f32.mrb[0].mxu0
      %v560 = vadd.f32 0.0, %v559
      %v561 = vpop.f32.mrb[0].mxu0
      %v562 = vadd.f32 0.0, %v561
      %v563 = vpop.f32.mrb[0].mxu0
      %v564 = vadd.f32 0.0, %v563
      %v565 = vpop.f32.mrb[0].mxu0
      %v566 = vadd.f32 0.0, %v565
      %567 = vmatprep.mubr.bf16.mxu0 0
      %568 = vmatmul.mubr.bf16.gmra.mrb[0].mxu0 %v383
      %v569 = vpop.f32.mrb[0].mxu0
      %v570 = vadd.f32 0.0, %v569
      %v571 = vpop.f32.mrb[0].mxu0
      %v572 = vadd.f32 0.0, %v571
      %v573 = vpop.f32.mrb[0].mxu0
      %v574 = vadd.f32 0.0, %v573
      %v575 = vpop.f32.mrb[0].mxu0
      %v576 = vadd.f32 0.0, %v575
      %577 = vmatprep.mubr.bf16.mxu0 0
      %578 = vmatmul.mubr.bf16.gmra.mrb[0].mxu0 %v386
      %v579 = vpop.f32.mrb[0].mxu0
      %v580 = vadd.f32 0.0, %v579
      %v581 = vpop.f32.mrb[0].mxu0
      %v582 = vadd.f32 0.0, %v581
      %v583 = vpop.f32.mrb[0].mxu0
      %v584 = vadd.f32 0.0, %v583
      %v585 = vpop.f32.mrb[0].mxu0
      %v586 = vadd.f32 0.0, %v585
      %587 = vdwg.mxu0
      %p588 = scmp.eq.s32.totalorder %s18, 0
      // Predicated region
      $region29: #{fuse_block_forward.2} parent=27 // pred_check
        %p589 = pneg %p588
      $region30: #{fuse_block_forward.2} parent=27 // pred_check_branch
        %591 = sbr.rel (%p589) target = $region32
      $region31: #{fuse_block_forward.2} parent=27 // pred_region
        %vm592 = vcmask 15360
        %593 = vst.msk [vmem:[%s171] sm:$0xff] %vm592, 0.0
        %594 = vst.msk [vmem:[%s171 + $0x8] sm:$0xff] %vm592, 0.0
        %595 = vst.msk [vmem:[%s171 + $0x10] sm:$0xff] %vm592, 0.0
        %596 = vst.msk [vmem:[%s171 + $0x18] sm:$0xff] %vm592, 0.0
        %597 = vst.msk [vmem:[%s171 + $0x20] sm:$0xff] %vm592, 0.0
        %598 = vst.msk [vmem:[%s171 + $0x28] sm:$0xff] %vm592, 0.0
        %599 = vst.msk [vmem:[%s171 + $0x30] sm:$0xff] %vm592, 0.0
        %600 = vst.msk [vmem:[%s171 + $0x38] sm:$0xff] %vm592, 0.0
        %601 = vst.msk [vmem:[%s171 + $0x40] sm:$0xff] %vm592, 0.0
        %602 = vst.msk [vmem:[%s171 + $0x48] sm:$0xff] %vm592, 0.0
        %603 = vst.msk [vmem:[%s171 + $0x50] sm:$0xff] %vm592, 0.0
        %604 = vst.msk [vmem:[%s171 + $0x58] sm:$0xff] %vm592, 0.0
        %605 = vst.msk [vmem:[%s171 + $0x60] sm:$0xff] %vm592, 0.0
        %606 = vst.msk [vmem:[%s171 + $0x68] sm:$0xff] %vm592, 0.0
        %607 = vst.msk [vmem:[%s171 + $0x70] sm:$0xff] %vm592, 0.0
        %608 = vst.msk [vmem:[%s171 + $0x78] sm:$0xff] %vm592, 0.0
        %609 = vst.msk [vmem:[%s171 + $0x80] sm:$0xff] %vm592, 0.0
        %610 = vst.msk [vmem:[%s171 + $0x88] sm:$0xff] %vm592, 0.0
        %611 = vst.msk [vmem:[%s171 + $0x90] sm:$0xff] %vm592, 0.0
        %612 = vst.msk [vmem:[%s171 + $0x98] sm:$0xff] %vm592, 0.0
        %613 = vst.msk [vmem:[%s171 + $0xa0] sm:$0xff] %vm592, 0.0
        %614 = vst.msk [vmem:[%s171 + $0xa8] sm:$0xff] %vm592, 0.0
        %615 = vst.msk [vmem:[%s171 + $0xb0] sm:$0xff] %vm592, 0.0
        %616 = vst.msk [vmem:[%s171 + $0xb8] sm:$0xff] %vm592, 0.0
        %617 = vst.msk [vmem:[%s171 + $0xc0] sm:$0xff] %vm592, 0.0
        %618 = vst.msk [vmem:[%s171 + $0xc8] sm:$0xff] %vm592, 0.0
        %619 = vst.msk [vmem:[%s171 + $0xd0] sm:$0xff] %vm592, 0.0
        %620 = vst.msk [vmem:[%s171 + $0xd8] sm:$0xff] %vm592, 0.0
        %621 = vst.msk [vmem:[%s171 + $0xe0] sm:$0xff] %vm592, 0.0
        %622 = vst.msk [vmem:[%s171 + $0xe8] sm:$0xff] %vm592, 0.0
        %623 = vst.msk [vmem:[%s171 + $0xf0] sm:$0xff] %vm592, 0.0
        %624 = vst.msk [vmem:[%s171 + $0xf8] sm:$0xff] %vm592, 0.0
      $region32: #{fuse_block_forward.2} parent=27 // pred_fallthru
        _
      %v625 = vadd.f32 %v430, %v432
      %626 = vadd.xlane.f32.xlu0 %v625
      %v627 = vpop.xlane.xlu0 %626
      %v628 = vadd.f32 %v434, %v436
      %629 = vadd.xlane.f32.xlu0 %v628
      %v630 = vpop.xlane.xlu0 %629
      %v631 = vadd.f32 %v440, %v442
      %632 = vadd.xlane.f32.xlu0 %v631
      %v633 = vpop.xlane.xlu0 %632
      %v634 = vadd.f32 %v444, %v446
      %635 = vadd.xlane.f32.xlu0 %v634
      %v636 = vpop.xlane.xlu0 %635
      %v637 = vadd.f32 %v450, %v452
      %638 = vadd.xlane.f32.xlu0 %v637
      %v639 = vpop.xlane.xlu0 %638
      %v640 = vadd.f32 %v454, %v456
      %641 = vadd.xlane.f32.xlu0 %v640
      %v642 = vpop.xlane.xlu0 %641
      %v643 = vadd.f32 %v460, %v462
      %644 = vadd.xlane.f32.xlu0 %v643
      %v645 = vpop.xlane.xlu0 %644
      %v646 = vadd.f32 %v464, %v466
      %647 = vadd.xlane.f32.xlu0 %v646
      %v648 = vpop.xlane.xlu0 %647
      %v649 = vadd.f32 %v470, %v472
      %650 = vadd.xlane.f32.xlu0 %v649
      %v651 = vpop.xlane.xlu0 %650
      %v652 = vadd.f32 %v474, %v476
      %653 = vadd.xlane.f32.xlu0 %v652
      %v654 = vpop.xlane.xlu0 %653
      %v655 = vadd.f32 %v480, %v482
      %656 = vadd.xlane.f32.xlu0 %v655
      %v657 = vpop.xlane.xlu0 %656
      %v658 = vadd.f32 %v484, %v486
      %659 = vadd.xlane.f32.xlu0 %v658
      %v660 = vpop.xlane.xlu0 %659
      %v661 = vadd.f32 %v490, %v492
      %662 = vadd.xlane.f32.xlu0 %v661
      %v663 = vpop.xlane.xlu0 %662
      %v664 = vadd.f32 %v494, %v496
      %665 = vadd.xlane.f32.xlu0 %v664
      %v666 = vpop.xlane.xlu0 %665
      %v667 = vadd.f32 %v500, %v502
      %668 = vadd.xlane.f32.xlu0 %v667
      %v669 = vpop.xlane.xlu0 %668
      %v670 = vadd.f32 %v504, %v506
      %671 = vadd.xlane.f32.xlu0 %v670
      %v672 = vpop.xlane.xlu0 %671
      %v673 = vadd.f32 %v510, %v512
      %674 = vadd.xlane.f32.xlu0 %v673
      %v675 = vpop.xlane.xlu0 %674
      %v676 = vadd.f32 %v514, %v516
      %677 = vadd.xlane.f32.xlu0 %v676
      %v678 = vpop.xlane.xlu0 %677
      %v679 = vadd.f32 %v520, %v522
      %680 = vadd.xlane.f32.xlu0 %v679
      %v681 = vpop.xlane.xlu0 %680
      %v682 = vadd.f32 %v524, %v526
      %683 = vadd.xlane.f32.xlu0 %v682
      %v684 = vpop.xlane.xlu0 %683
      %v685 = vadd.f32 %v530, %v532
      %686 = vadd.xlane.f32.xlu0 %v685
      %v687 = vpop.xlane.xlu0 %686
      %v688 = vadd.f32 %v534, %v536
      %689 = vadd.xlane.f32.xlu0 %v688
      %v690 = vpop.xlane.xlu0 %689
      %v691 = vadd.f32 %v540, %v542
      %692 = vadd.xlane.f32.xlu0 %v691
      %v693 = vpop.xlane.xlu0 %692
      %v694 = vadd.f32 %v544, %v546
      %695 = vadd.xlane.f32.xlu0 %v694
      %v696 = vpop.xlane.xlu0 %695
      %v697 = vadd.f32 %v550, %v552
      %698 = vadd.xlane.f32.xlu0 %v697
      %v699 = vpop.xlane.xlu0 %698
      %v700 = vadd.f32 %v554, %v556
      %701 = vadd.xlane.f32.xlu0 %v700
      %v702 = vpop.xlane.xlu0 %701
      %v703 = vadd.f32 %v560, %v562
      %704 = vadd.xlane.f32.xlu0 %v703
      %v705 = vpop.xlane.xlu0 %704
      %v706 = vadd.f32 %v564, %v566
      %707 = vadd.xlane.f32.xlu0 %v706
      %v708 = vpop.xlane.xlu0 %707
      %v709 = vadd.f32 %v570, %v572
      %710 = vadd.xlane.f32.xlu0 %v709
      %v711 = vpop.xlane.xlu0 %710
      %v712 = vadd.f32 %v574, %v576
      %713 = vadd.xlane.f32.xlu0 %v712
      %v714 = vpop.xlane.xlu0 %713
      %v715 = vadd.f32 %v580, %v582
      %716 = vadd.xlane.f32.xlu0 %v715
      %v717 = vpop.xlane.xlu0 %716
      %v718 = vadd.f32 %v584, %v586
      %719 = vadd.xlane.f32.xlu0 %v718
      %v720 = vpop.xlane.xlu0 %719
      %v721 = vmul.f32 %v430, %v430
      %v722 = vmul.f32 %v432, %v432
      %v723 = vmul.f32 %v434, %v434
      %v724 = vmul.f32 %v436, %v436
      %v725 = vmul.f32 %v440, %v440
      %v726 = vmul.f32 %v442, %v442
      %v727 = vmul.f32 %v444, %v444
      %v728 = vmul.f32 %v446, %v446
      %v729 = vmul.f32 %v450, %v450
      %v730 = vmul.f32 %v452, %v452
      %v731 = vmul.f32 %v454, %v454
      %v732 = vmul.f32 %v456, %v456
      %v733 = vmul.f32 %v460, %v460
      %v734 = vmul.f32 %v462, %v462
      %v735 = vmul.f32 %v464, %v464
      %v736 = vmul.f32 %v466, %v466
      %v737 = vmul.f32 %v470, %v470
      %v738 = vmul.f32 %v472, %v472
      %v739 = vmul.f32 %v474, %v474
      %v740 = vmul.f32 %v476, %v476
      %v741 = vmul.f32 %v480, %v480
      %v742 = vmul.f32 %v482, %v482
      %v743 = vmul.f32 %v484, %v484
      %v744 = vmul.f32 %v486, %v486
      %v745 = vmul.f32 %v490, %v490
      %v746 = vmul.f32 %v492, %v492
      %v747 = vmul.f32 %v494, %v494
      %v748 = vmul.f32 %v496, %v496
      %v749 = vmul.f32 %v500, %v500
      %v750 = vmul.f32 %v502, %v502
      %v751 = vmul.f32 %v504, %v504
      %v752 = vmul.f32 %v506, %v506
      %v753 = vmul.f32 %v510, %v510
      %v754 = vmul.f32 %v512, %v512
      %v755 = vmul.f32 %v514, %v514
      %v756 = vmul.f32 %v516, %v516
      %v757 = vmul.f32 %v520, %v520
      %v758 = vmul.f32 %v522, %v522
      %v759 = vmul.f32 %v524, %v524
      %v760 = vmul.f32 %v526, %v526
      %v761 = vmul.f32 %v530, %v530
      %v762 = vmul.f32 %v532, %v532
      %v763 = vmul.f32 %v534, %v534
      %v764 = vmul.f32 %v536, %v536
      %v765 = vmul.f32 %v540, %v540
      %v766 = vmul.f32 %v542, %v542
      %v767 = vmul.f32 %v544, %v544
      %v768 = vmul.f32 %v546, %v546
      %v769 = vmul.f32 %v550, %v550
      %v770 = vmul.f32 %v552, %v552
      %v771 = vmul.f32 %v554, %v554
      %v772 = vmul.f32 %v556, %v556
      %v773 = vmul.f32 %v560, %v560
      %v774 = vmul.f32 %v562, %v562
      %v775 = vmul.f32 %v564, %v564
      %v776 = vmul.f32 %v566, %v566
      %v777 = vmul.f32 %v570, %v570
      %v778 = vmul.f32 %v572, %v572
      %v779 = vmul.f32 %v574, %v574
      %v780 = vmul.f32 %v576, %v576
      %v781 = vmul.f32 %v580, %v580
      %v782 = vmul.f32 %v582, %v582
      %v783 = vmul.f32 %v584, %v584
      %v784 = vmul.f32 %v586, %v586
      %v785 = vadd.f32 %v721, %v722
      %786 = vadd.xlane.f32.xlu0 %v785
      %v787 = vpop.xlane.xlu0 %786
      %v788 = vadd.f32 %v723, %v724
      %789 = vadd.xlane.f32.xlu0 %v788
      %v790 = vpop.xlane.xlu0 %789
      %v791 = vadd.f32 %v725, %v726
      %792 = vadd.xlane.f32.xlu0 %v791
      %v793 = vpop.xlane.xlu0 %792
      %v794 = vadd.f32 %v727, %v728
      %795 = vadd.xlane.f32.xlu0 %v794
      %v796 = vpop.xlane.xlu0 %795
      %v797 = vadd.f32 %v729, %v730
      %798 = vadd.xlane.f32.xlu0 %v797
      %v799 = vpop.xlane.xlu0 %798
      %v800 = vadd.f32 %v731, %v732
      %801 = vadd.xlane.f32.xlu0 %v800
      %v802 = vpop.xlane.xlu0 %801
      %v803 = vadd.f32 %v733, %v734
      %804 = vadd.xlane.f32.xlu0 %v803
      %v805 = vpop.xlane.xlu0 %804
      %v806 = vadd.f32 %v735, %v736
      %807 = vadd.xlane.f32.xlu0 %v806
      %v808 = vpop.xlane.xlu0 %807
      %v809 = vadd.f32 %v737, %v738
      %810 = vadd.xlane.f32.xlu0 %v809
      %v811 = vpop.xlane.xlu0 %810
      %v812 = vadd.f32 %v739, %v740
      %813 = vadd.xlane.f32.xlu0 %v812
      %v814 = vpop.xlane.xlu0 %813
      %v815 = vadd.f32 %v741, %v742
      %816 = vadd.xlane.f32.xlu0 %v815
      %v817 = vpop.xlane.xlu0 %816
      %v818 = vadd.f32 %v743, %v744
      %819 = vadd.xlane.f32.xlu0 %v818
      %v820 = vpop.xlane.xlu0 %819
      %v821 = vadd.f32 %v745, %v746
      %822 = vadd.xlane.f32.xlu0 %v821
      %v823 = vpop.xlane.xlu0 %822
      %v824 = vadd.f32 %v747, %v748
      %825 = vadd.xlane.f32.xlu0 %v824
      %v826 = vpop.xlane.xlu0 %825
      %v827 = vadd.f32 %v749, %v750
      %828 = vadd.xlane.f32.xlu0 %v827
      %v829 = vpop.xlane.xlu0 %828
      %v830 = vadd.f32 %v751, %v752
      %831 = vadd.xlane.f32.xlu0 %v830
      %v832 = vpop.xlane.xlu0 %831
      %v833 = vadd.f32 %v753, %v754
      %834 = vadd.xlane.f32.xlu0 %v833
      %v835 = vpop.xlane.xlu0 %834
      %v836 = vadd.f32 %v755, %v756
      %837 = vadd.xlane.f32.xlu0 %v836
      %v838 = vpop.xlane.xlu0 %837
      %v839 = vadd.f32 %v757, %v758
      %840 = vadd.xlane.f32.xlu0 %v839
      %v841 = vpop.xlane.xlu0 %840
      %v842 = vadd.f32 %v759, %v760
      %843 = vadd.xlane.f32.xlu0 %v842
      %v844 = vpop.xlane.xlu0 %843
      %v845 = vadd.f32 %v761, %v762
      %846 = vadd.xlane.f32.xlu0 %v845
      %v847 = vpop.xlane.xlu0 %846
      %v848 = vadd.f32 %v763, %v764
      %849 = vadd.xlane.f32.xlu0 %v848
      %v850 = vpop.xlane.xlu0 %849
      %v851 = vadd.f32 %v765, %v766
      %852 = vadd.xlane.f32.xlu0 %v851
      %v853 = vpop.xlane.xlu0 %852
      %v854 = vadd.f32 %v767, %v768
      %855 = vadd.xlane.f32.xlu0 %v854
      %v856 = vpop.xlane.xlu0 %855
      %v857 = vadd.f32 %v769, %v770
      %858 = vadd.xlane.f32.xlu0 %v857
      %v859 = vpop.xlane.xlu0 %858
      %v860 = vadd.f32 %v771, %v772
      %861 = vadd.xlane.f32.xlu0 %v860
      %v862 = vpop.xlane.xlu0 %861
      %v863 = vadd.f32 %v773, %v774
      %864 = vadd.xlane.f32.xlu0 %v863
      %v865 = vpop.xlane.xlu0 %864
      %v866 = vadd.f32 %v775, %v776
      %867 = vadd.xlane.f32.xlu0 %v866
      %v868 = vpop.xlane.xlu0 %867
      %v869 = vadd.f32 %v777, %v778
      %870 = vadd.xlane.f32.xlu0 %v869
      %v871 = vpop.xlane.xlu0 %870
      %v872 = vadd.f32 %v779, %v780
      %873 = vadd.xlane.f32.xlu0 %v872
      %v874 = vpop.xlane.xlu0 %873
      %v875 = vadd.f32 %v781, %v782
      %876 = vadd.xlane.f32.xlu0 %v875
      %v877 = vpop.xlane.xlu0 %876
      %v878 = vadd.f32 %v783, %v784
      %879 = vadd.xlane.f32.xlu0 %v878
      %v880 = vpop.xlane.xlu0 %879
      %v881 = vlaneseq
      %v882 = vand.u32 %v881, 127
      %v883 = vld [vmem:[%s171] sm:$0xff]
      %v884 = vld [vmem:[%s171 + $0x8] sm:$0xff]
      %v885 = vld [vmem:[%s171 + $0x10] sm:$0xff]
      %v886 = vld [vmem:[%s171 + $0x18] sm:$0xff]
      %v887 = vld [vmem:[%s171 + $0x20] sm:$0xff]
      %v888 = vld [vmem:[%s171 + $0x28] sm:$0xff]
      %v889 = vld [vmem:[%s171 + $0x30] sm:$0xff]
      %v890 = vld [vmem:[%s171 + $0x38] sm:$0xff]
      %v891 = vld [vmem:[%s171 + $0x40] sm:$0xff]
      %v892 = vld [vmem:[%s171 + $0x48] sm:$0xff]
      %v893 = vld [vmem:[%s171 + $0x50] sm:$0xff]
      %v894 = vld [vmem:[%s171 + $0x58] sm:$0xff]
      %v895 = vld [vmem:[%s171 + $0x60] sm:$0xff]
      %v896 = vld [vmem:[%s171 + $0x68] sm:$0xff]
      %v897 = vld [vmem:[%s171 + $0x70] sm:$0xff]
      %v898 = vld [vmem:[%s171 + $0x78] sm:$0xff]
      %v899 = vld [vmem:[%s171 + $0x80] sm:$0xff]
      %v900 = vld [vmem:[%s171 + $0x88] sm:$0xff]
      %v901 = vld [vmem:[%s171 + $0x90] sm:$0xff]
      %v902 = vld [vmem:[%s171 + $0x98] sm:$0xff]
      %v903 = vld [vmem:[%s171 + $0xa0] sm:$0xff]
      %v904 = vld [vmem:[%s171 + $0xa8] sm:$0xff]
      %v905 = vld [vmem:[%s171 + $0xb0] sm:$0xff]
      %v906 = vld [vmem:[%s171 + $0xb8] sm:$0xff]
      %v907 = vld [vmem:[%s171 + $0xc0] sm:$0xff]
      %v908 = vld [vmem:[%s171 + $0xc8] sm:$0xff]
      %v909 = vld [vmem:[%s171 + $0xd0] sm:$0xff]
      %v910 = vld [vmem:[%s171 + $0xd8] sm:$0xff]
      %v911 = vld [vmem:[%s171 + $0xe0] sm:$0xff]
      %v912 = vld [vmem:[%s171 + $0xe8] sm:$0xff]
      %v913 = vld [vmem:[%s171 + $0xf0] sm:$0xff]
      %v914 = vld [vmem:[%s171 + $0xf8] sm:$0xff]
      %vm915 = vcmp.eq.s32.totalorder %v882, 0
      %v916 = vsel %vm915, %v627, %v787
      %v917 = vsel %vm915, %v630, %v790
      %v918 = vsel %vm915, %v633, %v793
      %v919 = vsel %vm915, %v636, %v796
      %v920 = vsel %vm915, %v639, %v799
      %v921 = vsel %vm915, %v642, %v802
      %v922 = vsel %vm915, %v645, %v805
      %v923 = vsel %vm915, %v648, %v808
      %v924 = vsel %vm915, %v651, %v811
      %v925 = vsel %vm915, %v654, %v814
      %v926 = vsel %vm915, %v657, %v817
      %v927 = vsel %vm915, %v660, %v820
      %v928 = vsel %vm915, %v663, %v823
      %v929 = vsel %vm915, %v666, %v826
      %v930 = vsel %vm915, %v669, %v829
      %v931 = vsel %vm915, %v672, %v832
      %v932 = vsel %vm915, %v675, %v835
      %v933 = vsel %vm915, %v678, %v838
      %v934 = vsel %vm915, %v681, %v841
      %v935 = vsel %vm915, %v684, %v844
      %v936 = vsel %vm915, %v687, %v847
      %v937 = vsel %vm915, %v690, %v850
      %v938 = vsel %vm915, %v693, %v853
      %v939 = vsel %vm915, %v696, %v856
      %v940 = vsel %vm915, %v699, %v859
      %v941 = vsel %vm915, %v702, %v862
      %v942 = vsel %vm915, %v705, %v865
      %v943 = vsel %vm915, %v708, %v868
      %v944 = vsel %vm915, %v711, %v871
      %v945 = vsel %vm915, %v714, %v874
      %v946 = vsel %vm915, %v717, %v877
      %v947 = vsel %vm915, %v720, %v880
      %v948 = vadd.f32 %v883, %v916
      %v949 = vadd.f32 %v884, %v917
      %v950 = vadd.f32 %v885, %v918
      %v951 = vadd.f32 %v886, %v919
      %v952 = vadd.f32 %v887, %v920
      %v953 = vadd.f32 %v888, %v921
      %v954 = vadd.f32 %v889, %v922
      %v955 = vadd.f32 %v890, %v923
      %v956 = vadd.f32 %v891, %v924
      %v957 = vadd.f32 %v892, %v925
      %v958 = vadd.f32 %v893, %v926
      %v959 = vadd.f32 %v894, %v927
      %v960 = vadd.f32 %v895, %v928
      %v961 = vadd.f32 %v896, %v929
      %v962 = vadd.f32 %v897, %v930
      %v963 = vadd.f32 %v898, %v931
      %v964 = vadd.f32 %v899, %v932
      %v965 = vadd.f32 %v900, %v933
      %v966 = vadd.f32 %v901, %v934
      %v967 = vadd.f32 %v902, %v935
      %v968 = vadd.f32 %v903, %v936
      %v969 = vadd.f32 %v904, %v937
      %v970 = vadd.f32 %v905, %v938
      %v971 = vadd.f32 %v906, %v939
      %v972 = vadd.f32 %v907, %v940
      %v973 = vadd.f32 %v908, %v941
      %v974 = vadd.f32 %v909, %v942
      %v975 = vadd.f32 %v910, %v943
      %v976 = vadd.f32 %v911, %v944
      %v977 = vadd.f32 %v912, %v945
      %v978 = vadd.f32 %v913, %v946
      %v979 = vadd.f32 %v914, %v947
      %vm980 = vcmask 15360
      %981 = vst.msk [vmem:[%s171] sm:$0xff] %vm980, %v948
      %982 = vst.msk [vmem:[%s171 + $0x8] sm:$0xff] %vm980, %v949
      %983 = vst.msk [vmem:[%s171 + $0x10] sm:$0xff] %vm980, %v950
      %984 = vst.msk [vmem:[%s171 + $0x18] sm:$0xff] %vm980, %v951
      %985 = vst.msk [vmem:[%s171 + $0x20] sm:$0xff] %vm980, %v952
      %986 = vst.msk [vmem:[%s171 + $0x28] sm:$0xff] %vm980, %v953
      %987 = vst.msk [vmem:[%s171 + $0x30] sm:$0xff] %vm980, %v954
      %988 = vst.msk [vmem:[%s171 + $0x38] sm:$0xff] %vm980, %v955
      %989 = vst.msk [vmem:[%s171 + $0x40] sm:$0xff] %vm980, %v956
      %990 = vst.msk [vmem:[%s171 + $0x48] sm:$0xff] %vm980, %v957
      %991 = vst.msk [vmem:[%s171 + $0x50] sm:$0xff] %vm980, %v958
      %992 = vst.msk [vmem:[%s171 + $0x58] sm:$0xff] %vm980, %v959
      %993 = vst.msk [vmem:[%s171 + $0x60] sm:$0xff] %vm980, %v960
      %994 = vst.msk [vmem:[%s171 + $0x68] sm:$0xff] %vm980, %v961
      %995 = vst.msk [vmem:[%s171 + $0x70] sm:$0xff] %vm980, %v962
      %996 = vst.msk [vmem:[%s171 + $0x78] sm:$0xff] %vm980, %v963
      %997 = vst.msk [vmem:[%s171 + $0x80] sm:$0xff] %vm980, %v964
      %998 = vst.msk [vmem:[%s171 + $0x88] sm:$0xff] %vm980, %v965
      %999 = vst.msk [vmem:[%s171 + $0x90] sm:$0xff] %vm980, %v966
      %1000 = vst.msk [vmem:[%s171 + $0x98] sm:$0xff] %vm980, %v967
      %1001 = vst.msk [vmem:[%s171 + $0xa0] sm:$0xff] %vm980, %v968
      %1002 = vst.msk [vmem:[%s171 + $0xa8] sm:$0xff] %vm980, %v969
      %1003 = vst.msk [vmem:[%s171 + $0xb0] sm:$0xff] %vm980, %v970
      %1004 = vst.msk [vmem:[%s171 + $0xb8] sm:$0xff] %vm980, %v971
      %1005 = vst.msk [vmem:[%s171 + $0xc0] sm:$0xff] %vm980, %v972
      %1006 = vst.msk [vmem:[%s171 + $0xc8] sm:$0xff] %vm980, %v973
      %1007 = vst.msk [vmem:[%s171 + $0xd0] sm:$0xff] %vm980, %v974
      %1008 = vst.msk [vmem:[%s171 + $0xd8] sm:$0xff] %vm980, %v975
      %1009 = vst.msk [vmem:[%s171 + $0xe0] sm:$0xff] %vm980, %v976
      %1010 = vst.msk [vmem:[%s171 + $0xe8] sm:$0xff] %vm980, %v977
      %1011 = vst.msk [vmem:[%s171 + $0xf0] sm:$0xff] %vm980, %v978
      %1012 = vst.msk [vmem:[%s171 + $0xf8] sm:$0xff] %vm980, %v979
      %p1013 = scmp.lt.s32.totalorder %s17, 1
      %s1014 = scalar_select %p1013, %s17, 1
      %s1015 = smul.addr %s1014, 32
      %s1016 = smul.addr %s1015, 8
      %s1017 = scalar_lea.vmem %s2, %s1016
      // Predicated region
      $region33: #{fuse_block_forward.2} parent=27 // pred_check
        %p1018 = pneg %p92
      $region34: #{fuse_block_forward.2} parent=27 // pred_check_branch
        %1020 = sbr.rel (%p1018) target = $region36
      $region35: #{fuse_block_forward.2} parent=27 // pred_region
        _
      $region36: #{fuse_block_forward.2} parent=27 // pred_fallthru
        _
    $region28: #{fuse_block_forward.2} parent=5 // pred_fallthru
      _
    %p1021 = scmp.le.s32.totalorder 2, %s8
    // Predicated region
    $region37: #{fuse_block_forward.2} parent=5 // pred_check
      %p1022 = pneg %p1021
    $region38: #{fuse_block_forward.2} parent=5 // pred_check_branch
      %1024 = sbr.rel (%p1022) target = $region40
    $region39: #{fuse_block_forward.2} parent=5 // pred_region
      %s1025 = ssub.s32 %s8, 2
      // Predicated region
      $region41: #{fuse_block_forward.2} parent=39 // pred_check
        %p1026 = pneg %p98
      $region42: #{fuse_block_forward.2} parent=39 // pred_check_branch
        %1028 = sbr.rel (%p1026) target = $region44
      $region43: #{fuse_block_forward.2} parent=39 // pred_region
        %p1029 = scmp.lt.s32.totalorder %s19, 1
        %s1030 = scalar_select %p1029, %s19, 1
        %s1031 = smul.addr %s1030, 32
        %s1032 = smul.addr %s1031, 8
        %s1033 = scalar_lea.vmem %s2, %s1032
      $region44: #{fuse_block_forward.2} parent=39 // pred_fallthru
        _
    $region40: #{fuse_block_forward.2} parent=5 // pred_fallthru
      _
  $region6: #{fuse_block_forward.2} parent=0 // loop_footer
    %s12 = sadd.s32 1, %s8
  $region7: #{fuse_block_forward.2} parent=0 // loop_footer_branch
    %7 = sbr.rel target = $region3
  $region8: #{fuse_block_forward.2} parent=0 // loop_exit
    _

// kernel: fuse_block_forward.3
$region0: #{fuse_block_forward.3}
  #allocation0 [shape = 'u32[]', space=smem, size = 0x4, offset = 0x4, fixed_abs, tag = 'smem constant byte address 0x4 - core index']
  #allocation1 [shape = 'u32[144,128]{1,0:T(1,128)}', space=vmem, size = 0x12000, scoped, tag = 'internal scratch']
  %s0 = inlined_call_operand.vmem [shape: bf16[2,72,256], index: 0, kind: input, shape index: {}]
  %s1 = inlined_call_operand.vmem [shape: bf16[256,72], index: 1, kind: input, shape index: {}]
  %s2 = inlined_call_operand.vmem [shape: f32[256,2], index: 2, kind: input, shape index: {}]
  %s3 = inlined_call_operand.vmem [shape: f32[2,256,256], index: 3, kind: output, shape index: {}]
  %s4 = sld [smem:[#allocation0]]
  $region45: #{fuse_block_forward.3} parent=0
    _
  %s6 = ssub.s32 1, %s4
  %s7 = scalar_select 0, %s6, %s4
  loop: start=0, step=1, limit=4
  $region2: #{fuse_block_forward.3} parent=0 // loop_pre_header
    _
  $region3: #{fuse_block_forward.3} parent=0 // loop_header
    %s9 = sphi 0, %s13
    %p10 = scmp.ge.s32.totalorder %s9, 4
    %s16 = sphi 0, %s28
    %s17 = sphi 0, %s24
    %s18 = sphi 0, %s16
    %s19 = sphi 0, %s17
    %s20 = sphi 0, %s18
    %s21 = sphi 0, %s19
    %s33 = sphi 0, %s35
    %s36 = sphi 0, %s33
    %s37 = sphi 0, %s36
    %s53 = sphi 0, %s37
    %s57 = sphi 0, %s57
    %s59 = sphi 0, %s57
    %s60 = sphi 0, %s59
    %s74 = sphi 0, %s60
    %s78 = sphi 0, %s78
    %s80 = sphi 0, %s78
    %s81 = sphi 0, %s80
    %s95 = sphi 0, %s81
    %s103 = sphi 0, %s105
    %s106 = sphi 0, %s103
    %s107 = sphi 0, %s106
    %s123 = sphi 0, %s107
  $region4: #{fuse_block_forward.3} parent=0 // loop_header_branch
    %12 = sbr.rel (%p10) target = $region8
  $region5: #{fuse_block_forward.3} parent=0 // loop_body
    %s14 = ssub.s32 %s9, 1
    %s15 = ssub.s32 %s9, 2
    %s22 = sadd.s32 1, %s17
    %p23 = scmp.ge.s32.totalorder %s22, 1
    %s24 = scalar_select %p23, 0, %s22
    %s25 = sadd.s32 1, %s16
    %s26 = scalar_select %p23, %s25, %s16
    %p27 = scmp.ge.s32.totalorder %s26, 2
    %s28 = scalar_select %p27, 0, %s26
    %s29 = ssub.s32 %s16, %s28
    %s30 = ssub.s32 %s17, %s24
    %s31 = sor.u32 %s29, %s30
    %p32 = scmp.eq.s32.totalorder %s31, 0
    %s34 = sadd.s32 %s33, 1
    %s35 = scalar_select %p32, %s33, %s34
    %p38 = pneg %p32
    %p39 = scmp.eq.s32.totalorder %s9, 1
    %p40 = por %p38, %p39
    %p41 = scmp.ne.s32.totalorder %s33, %s36
    %p42 = scmp.eq.s32.totalorder %s9, 0
    %p43 = por %p41, %p42
    %p44 = scmp.ne.s32.totalorder %s33, %s36
    %p45 = scmp.eq.s32.totalorder %s14, 1
    %p46 = por %p44, %p45
    %p47 = scmp.ne.s32.totalorder %s36, %s37
    %p48 = scmp.eq.s32.totalorder %s14, 0
    %p49 = por %p47, %p48
    %p50 = scmp.ne.s32.totalorder %s36, %s37
    %p51 = scmp.eq.s32.totalorder %s15, 1
    %p52 = por %p50, %p51
    %p54 = scmp.ne.s32.totalorder %s37, %s53
    %p55 = scmp.eq.s32.totalorder %s15, 0
    %p56 = por %p54, %p55
    %s58 = sadd.s32 %s57, 1
    %p61 = scmp.eq.s32.totalorder %s9, 1
    %p62 = scmp.ne.s32.totalorder %s57, %s59
    %p63 = scmp.eq.s32.totalorder %s9, 0
    %p64 = por %p62, %p63
    %p65 = scmp.ne.s32.totalorder %s57, %s59
    %p66 = scmp.eq.s32.totalorder %s14, 1
    %p67 = por %p65, %p66
    %p68 = scmp.ne.s32.totalorder %s59, %s60
    %p69 = scmp.eq.s32.totalorder %s14, 0
    %p70 = por %p68, %p69
    %p71 = scmp.ne.s32.totalorder %s59, %s60
    %p72 = scmp.eq.s32.totalorder %s15, 1
    %p73 = por %p71, %p72
    %p75 = scmp.ne.s32.totalorder %s60, %s74
    %p76 = scmp.eq.s32.totalorder %s15, 0
    %p77 = por %p75, %p76
    %s79 = sadd.s32 %s78, 1
    %p82 = scmp.eq.s32.totalorder %s9, 1
    %p83 = scmp.ne.s32.totalorder %s78, %s80
    %p84 = scmp.eq.s32.totalorder %s9, 0
    %p85 = por %p83, %p84
    %p86 = scmp.ne.s32.totalorder %s78, %s80
    %p87 = scmp.eq.s32.totalorder %s14, 1
    %p88 = por %p86, %p87
    %p89 = scmp.ne.s32.totalorder %s80, %s81
    %p90 = scmp.eq.s32.totalorder %s14, 0
    %p91 = por %p89, %p90
    %p92 = scmp.ne.s32.totalorder %s80, %s81
    %p93 = scmp.eq.s32.totalorder %s15, 1
    %p94 = por %p92, %p93
    %p96 = scmp.ne.s32.totalorder %s81, %s95
    %p97 = scmp.eq.s32.totalorder %s15, 0
    %p98 = por %p96, %p97
    %s99 = ssub.s32 %s16, %s28
    %s100 = ssub.s32 %s17, %s24
    %s101 = sor.u32 %s99, %s100
    %p102 = scmp.eq.s32.totalorder %s101, 0
    %s104 = sadd.s32 %s103, 1
    %s105 = scalar_select %p102, %s103, %s104
    %p108 = pneg %p102
    %p109 = scmp.eq.s32.totalorder %s9, 1
    %p110 = por %p108, %p109
    %p111 = scmp.ne.s32.totalorder %s103, %s106
    %p112 = scmp.eq.s32.totalorder %s9, 0
    %p113 = por %p111, %p112
    %p114 = scmp.ne.s32.totalorder %s103, %s106
    %p115 = scmp.eq.s32.totalorder %s14, 1
    %p116 = por %p114, %p115
    %p117 = scmp.ne.s32.totalorder %s106, %s107
    %p118 = scmp.eq.s32.totalorder %s14, 0
    %p119 = por %p117, %p118
    %p120 = scmp.ne.s32.totalorder %s106, %s107
    %p121 = scmp.eq.s32.totalorder %s15, 1
    %p122 = por %p120, %p121
    %p124 = scmp.ne.s32.totalorder %s107, %s123
    %p125 = scmp.eq.s32.totalorder %s15, 0
    %p126 = por %p124, %p125
    %p127 = scmp.le.s32.totalorder 1, %s9
    %p128 = scmp.lt.s32.totalorder %s9, 3
    %p129 = pnand %p127, %p128
    %p130 = pneg %p129
    // Predicated region
    $region9: #{fuse_block_forward.3} parent=5 // pred_check
      _
    $region10: #{fuse_block_forward.3} parent=5 // pred_check_branch
      %132 = sbr.rel (%p129) target = $region12
    $region11: #{fuse_block_forward.3} parent=5 // pred_region
      %s133 = ssub.s32 %s9, 1
      // Predicated region
      $region13: #{fuse_block_forward.3} parent=11 // pred_check
        %p134 = pneg %p70
      $region14: #{fuse_block_forward.3} parent=11 // pred_check_branch
        %136 = sbr.rel (%p134) target = $region16
      $region15: #{fuse_block_forward.3} parent=11 // pred_region
        _
      $region16: #{fuse_block_forward.3} parent=11 // pred_fallthru
        _
      // Predicated region
      $region17: #{fuse_block_forward.3} parent=11 // pred_check
        %p137 = pneg %p91
      $region18: #{fuse_block_forward.3} parent=11 // pred_check_branch
        %139 = sbr.rel (%p137) target = $region20
      $region19: #{fuse_block_forward.3} parent=11 // pred_region
        _
      $region20: #{fuse_block_forward.3} parent=11 // pred_fallthru
        _
    $region12: #{fuse_block_forward.3} parent=5 // pred_fallthru
      _
    %p140 = scmp.lt.s32.totalorder %s9, 2
    // Predicated region
    $region21: #{fuse_block_forward.3} parent=5 // pred_check
      %p141 = pneg %p140
    $region22: #{fuse_block_forward.3} parent=5 // pred_check_branch
      %143 = sbr.rel (%p141) target = $region24
    $region23: #{fuse_block_forward.3} parent=5 // pred_region
      // Predicated region
      $region25: #{fuse_block_forward.3} parent=23 // pred_check
        %p144 = pneg %p43
      $region26: #{fuse_block_forward.3} parent=23 // pred_check_branch
        %146 = sbr.rel (%p144) target = $region28
      $region27: #{fuse_block_forward.3} parent=23 // pred_region
        %s147 = smul.u32 2, %s17
        %p148 = scmp.lt.s32.totalorder %s16, 1
        %s149 = scalar_select %p148, %s16, 1
        %p150 = scmp.lt.s32.totalorder %s147, 1
        %s151 = scalar_select %p150, %s147, 1
        %s152 = smul.addr %s149, 18
        %s153 = sadd.s32 %s151, %s152
        %s154 = smul.addr %s153, 4
        %s155 = scalar_lea.vmem %s0, %s154
        %s156 = smul.u32 2, %s17
      $region28: #{fuse_block_forward.3} parent=23 // pred_fallthru
        _
    $region24: #{fuse_block_forward.3} parent=5 // pred_fallthru
      _
    %p157 = scmp.le.s32.totalorder 1, %s9
    %p158 = scmp.lt.s32.totalorder %s9, 3
    %p159 = pnand %p157, %p158
    %p160 = pneg %p159
    // Predicated region
    $region29: #{fuse_block_forward.3} parent=5 // pred_check
      _
    $region30: #{fuse_block_forward.3} parent=5 // pred_check_branch
      %162 = sbr.rel (%p159) target = $region32
    $region31: #{fuse_block_forward.3} parent=5 // pred_region
      %s163 = ssub.s32 %s9, 1
      %s164 = smul.u32 2, %s19
      %p165 = scmp.lt.s32.totalorder %s18, 1
      %s166 = scalar_select %p165, %s18, 1
      %p167 = scmp.lt.s32.totalorder %s164, 1
      %s168 = scalar_select %p167, %s164, 1
      %s169 = smul.addr %s166, 18
      %s170 = sadd.s32 %s168, %s169
      %s171 = smul.addr %s170, 4
      %s172 = scalar_lea.vmem %s0, %s171
      %p173 = pneg %p49
      %p174 = pneg %p46
      %p175 = pneg %p70
      %p176 = pneg %p67
      %p177 = pneg %p91
      %p178 = pneg %p88
      %p179 = pneg %p119
      %p180 = pneg %p116
      %s181 = smul.u32 2, %s19
      %p182 = scmp.lt.s32.totalorder %s18, 1
      %s183 = scalar_select %p182, %s18, 1
      %p184 = scmp.lt.s32.totalorder %s181, 1
      %s185 = scalar_select %p184, %s181, 1
      %s186 = smul.addr %s183, 64
      %s187 = sadd.s32 %s185, %s186
      %s188 = smul.addr %s187, 8
      %s189 = scalar_lea.vmem %s3, %s188
      %s190 = smul.u32 2, %s19
      %p191 = scmp.lt.s32.totalorder %s18, 1
      %s192 = scalar_select %p191, %s18, 1
      %p193 = scmp.lt.s32.totalorder %s190, 1
      %s194 = scalar_select %p193, %s190, 1
      %s195 = smul.addr %s192, 18
      %s196 = sadd.s32 %s194, %s195
      %s197 = smul.addr %s196, 4
      %s198 = scalar_lea.vmem %s0, %s197
      %s199 = smul.u32 2, %s19
      %s200 = smul.u32 2, %s19
      %p201 = scmp.lt.s32.totalorder %s18, 1
      %s202 = scalar_select %p201, %s18, 1
      %p203 = scmp.lt.s32.totalorder %s200, 1
      %s204 = scalar_select %p203, %s200, 1
      %s205 = smul.addr %s202, 64
      %s206 = sadd.s32 %s204, %s205
      %s207 = smul.addr %s206, 8
      %s208 = scalar_lea.vmem %s3, %s207
      %s209 = smul.u32 2, %s19
      %v211 = vld [vmem:[%s1] sm:$0xf]
      %v212 = vld [vmem:[%s1 + $0x4] sm:$0xf]
      %v213 = vld [vmem:[%s1 + $0x8] sm:$0xf]
      %v214 = vld [vmem:[%s1 + $0xc] sm:$0xf]
      %v215 = vld [vmem:[%s1 + $0x10] sm:$0xf]
      %v216 = vld [vmem:[%s1 + $0x14] sm:$0xf]
      %v217 = vld [vmem:[%s1 + $0x18] sm:$0xf]
      %v218 = vld [vmem:[%s1 + $0x1c] sm:$0xf]
      %v219 = vld [vmem:[%s1 + $0x20] sm:$0xf]
      %v220 = vld [vmem:[%s1 + $0x24] sm:$0xf]
      %v221 = vld [vmem:[%s1 + $0x28] sm:$0xf]
      %v222 = vld [vmem:[%s1 + $0x2c] sm:$0xf]
      %v223 = vld [vmem:[%s1 + $0x30] sm:$0xf]
      %v224 = vld [vmem:[%s1 + $0x34] sm:$0xf]
      %v225 = vld [vmem:[%s1 + $0x38] sm:$0xf]
      %v226 = vld [vmem:[%s1 + $0x3c] sm:$0xf]
      %v227 = vld [vmem:[%s1 + $0x40] sm:$0xf]
      %v228 = vld [vmem:[%s1 + $0x44] sm:$0xf]
      %v229 = vld [vmem:[%s1 + $0x48] sm:$0xf]
      %v230 = vld [vmem:[%s1 + $0x4c] sm:$0xf]
      %v231 = vld [vmem:[%s1 + $0x50] sm:$0xf]
      %v232 = vld [vmem:[%s1 + $0x54] sm:$0xf]
      %v233 = vld [vmem:[%s1 + $0x58] sm:$0xf]
      %v234 = vld [vmem:[%s1 + $0x5c] sm:$0xf]
      %v235 = vld [vmem:[%s1 + $0x60] sm:$0xf]
      %v236 = vld [vmem:[%s1 + $0x64] sm:$0xf]
      %v237 = vld [vmem:[%s1 + $0x68] sm:$0xf]
      %v238 = vld [vmem:[%s1 + $0x6c] sm:$0xf]
      %v239 = vld [vmem:[%s1 + $0x70] sm:$0xf]
      %v240 = vld [vmem:[%s1 + $0x74] sm:$0xf]
      %v241 = vld [vmem:[%s1 + $0x78] sm:$0xf]
      %v242 = vld [vmem:[%s1 + $0x7c] sm:$0xf]
      %v243 = vld [vmem:[%s198] sm:$0xff]
      %v244 = vld [vmem:[%s198 + $0x8] sm:$0xff]
      %v245 = vld [vmem:[%s198 + $0x10] sm:$0xff]
      %v246 = vld [vmem:[%s198 + $0x18] sm:$0xff]
      %v247 = vld [vmem:[%s198 + $0x20] sm:$0xff]
      %v248 = vld [vmem:[%s198 + $0x28] sm:$0xff]
      %v249 = vld [vmem:[%s198 + $0x30] sm:$0xff]
      %v250 = vld [vmem:[%s198 + $0x38] sm:$0xff]
      %v251 = vld [vmem:[%s198 + $0x40] sm:$0xff]
      %v284 = vunpack.c.l.b16 %v211
      %v285 = vunpack.c.l.b16 %v212
      %v286 = vunpack.c.l.b16 %v213
      %v287 = vunpack.c.l.b16 %v214
      %v288 = vunpack.c.l.b16 %v215
      %v289 = vunpack.c.l.b16 %v216
      %v290 = vunpack.c.l.b16 %v217
      %v291 = vunpack.c.l.b16 %v218
      %v292 = vunpack.c.l.b16 %v219
      %v293 = vunpack.c.l.b16 %v220
      %v294 = vunpack.c.l.b16 %v221
      %v295 = vunpack.c.l.b16 %v222
      %v296 = vunpack.c.l.b16 %v223
      %v297 = vunpack.c.l.b16 %v224
      %v298 = vunpack.c.l.b16 %v225
      %v299 = vunpack.c.l.b16 %v226
      %v300 = vunpack.c.l.b16 %v227
      %v301 = vunpack.c.l.b16 %v228
      %v302 = vunpack.c.l.b16 %v229
      %v303 = vunpack.c.l.b16 %v230
      %v304 = vunpack.c.l.b16 %v231
      %v305 = vunpack.c.l.b16 %v232
      %v306 = vunpack.c.l.b16 %v233
      %v307 = vunpack.c.l.b16 %v234
      %v308 = vunpack.c.l.b16 %v235
      %v309 = vunpack.c.l.b16 %v236
      %v310 = vunpack.c.l.b16 %v237
      %v311 = vunpack.c.l.b16 %v238
      %v312 = vunpack.c.l.b16 %v239
      %v313 = vunpack.c.l.b16 %v240
      %v314 = vunpack.c.l.b16 %v241
      %v315 = vunpack.c.l.b16 %v242
      %v316 = vpack.c.b16 %v285, %v284
      %v317 = vpack.c.b16 %v287, %v286
      %v318 = vpack.c.b16 %v289, %v288
      %v319 = vpack.c.b16 %v291, %v290
      %v320 = vpack.c.b16 %v293, %v292
      %v321 = vpack.c.b16 %v295, %v294
      %v322 = vpack.c.b16 %v297, %v296
      %v323 = vpack.c.b16 %v299, %v298
      %v324 = vpack.c.b16 %v301, %v300
      %v325 = vpack.c.b16 %v303, %v302
      %v326 = vpack.c.b16 %v305, %v304
      %v327 = vpack.c.b16 %v307, %v306
      %v328 = vpack.c.b16 %v309, %v308
      %v329 = vpack.c.b16 %v311, %v310
      %v330 = vpack.c.b16 %v313, %v312
      %v331 = vpack.c.b16 %v315, %v314
      %v341 = vunpack.c.l.b16 %v243
      %v342 = vunpack.c.h.b16 %v243
      %v343 = vunpack.c.l.b16 %v244
      %v344 = vunpack.c.h.b16 %v244
      %v345 = vunpack.c.l.b16 %v245
      %v346 = vunpack.c.h.b16 %v245
      %v347 = vunpack.c.l.b16 %v246
      %v348 = vunpack.c.h.b16 %v246
      %v349 = vunpack.c.l.b16 %v247
      %v350 = vunpack.c.h.b16 %v247
      %v351 = vunpack.c.l.b16 %v248
      %v352 = vunpack.c.h.b16 %v248
      %v353 = vunpack.c.l.b16 %v249
      %v354 = vunpack.c.h.b16 %v249
      %v355 = vunpack.c.l.b16 %v250
      %v356 = vunpack.c.h.b16 %v250
      %v357 = vunpack.c.l.b16 %v251
      %v358 = vunpack.c.h.b16 %v251
      %v359 = vpack.c.b16 %v343, %v341
      %v360 = vpack.c.b16 %v344, %v342
      %v361 = vpack.c.b16 %v347, %v345
      %v362 = vpack.c.b16 %v348, %v346
      %v363 = vpack.c.b16 %v351, %v349
      %v364 = vpack.c.b16 %v352, %v350
      %v365 = vpack.c.b16 %v355, %v353
      %v366 = vpack.c.b16 %v356, %v354
      %v367 = vpack.c.b16 %v357, %v357
      %v368 = vpack.c.b16 %v358, %v358
      %vm377 = vcmask 588800
      %v379 = vsel %vm377, %v316, 0
      %v382 = vsel %vm377, %v317, 0
      %v385 = vsel %vm377, %v318, 0
      %v388 = vsel %vm377, %v319, 0
      %v391 = vsel %vm377, %v320, 0
      %v394 = vsel %vm377, %v321, 0
      %v397 = vsel %vm377, %v322, 0
      %v400 = vsel %vm377, %v323, 0
      %v403 = vsel %vm377, %v324, 0
      %v406 = vsel %vm377, %v325, 0
      %v409 = vsel %vm377, %v326, 0
      %v412 = vsel %vm377, %v327, 0
      %v415 = vsel %vm377, %v328, 0
      %v418 = vsel %vm377, %v329, 0
      %v421 = vsel %vm377, %v330, 0
      %v424 = vsel %vm377, %v331, 0
      %vm426 = vcmask 1043456
      %v428 = vsel %vm426, %v367, 0
      %v431 = vsel %vm426, %v368, 0
      %433 = vmatprep.subr.bf16.mxu0 %v360
      %434 = vmatpush1.bf16.msra.mxu0 %v359
      %435 = vmatprep.subr.bf16.mxu0 %v362
      %436 = vmatpush1.bf16.msra.mxu0 %v361
      %437 = vmatprep.subr.bf16.mxu0 %v364
      %438 = vmatpush1.bf16.msra.mxu0 %v363
      %439 = vmatprep.subr.bf16.mxu0 %v366
      %440 = vmatpush1.bf16.msra.mxu0 %v365
      %441 = vmatprep.subr.bf16.mxu0 %v431
      %442 = vmatpush1.bf16.msra.mxu0 %v428
      %443 = vmatprep.subr.bf16.mxu0 0
      %444 = vmatpush1.bf16.msra.mxu0 0
      %445 = vmatprep.subr.bf16.mxu0 0
      %446 = vmatpush1.bf16.msra.mxu0 0
      %447 = vmatprep.subr.bf16.mxu0 0
      %448 = vmatpush1.bf16.msra.mxu0 0
      %449 = vmatprep.subr.bf16.mxu0 0
      %450 = vmatpush1.bf16.msra.mxu0 0
      %451 = vmatprep.subr.bf16.mxu0 0
      %452 = vmatpush1.bf16.msra.mxu0 0
      %453 = vmatprep.subr.bf16.mxu0 0
      %454 = vmatpush1.bf16.msra.mxu0 0
      %455 = vmatprep.subr.bf16.mxu0 0
      %456 = vmatpush1.bf16.msra.mxu0 0
      %457 = vmatprep.subr.bf16.mxu0 0
      %458 = vmatpush1.bf16.msra.mxu0 0
      %459 = vmatprep.subr.bf16.mxu0 0
      %460 = vmatpush1.bf16.msra.mxu0 0
      %461 = vmatprep.subr.bf16.mxu0 0
      %462 = vmatpush1.bf16.msra.mxu0 0
      %463 = vmatprep.subr.bf16.mxu0 0
      %464 = vmatpush1.bf16.msra.mxu0 0
      %465 = vmatprep.mubr.bf16.mxu0 0
      %466 = vmatmul.mubr.bf16.gmra.mrb[0].mxu0 %v379
      %v467 = vpop.f32.mrb[0].mxu0
      %v468 = vadd.f32 0.0, %v467
      %v469 = vpop.f32.mrb[0].mxu0
      %v470 = vadd.f32 0.0, %v469
      %v471 = vpop.f32.mrb[0].mxu0
      %v472 = vadd.f32 0.0, %v471
      %v473 = vpop.f32.mrb[0].mxu0
      %v474 = vadd.f32 0.0, %v473
      %475 = vmatprep.mubr.bf16.mxu0 0
      %476 = vmatmul.mubr.bf16.gmra.mrb[0].mxu0 %v382
      %v477 = vpop.f32.mrb[0].mxu0
      %v478 = vadd.f32 0.0, %v477
      %v479 = vpop.f32.mrb[0].mxu0
      %v480 = vadd.f32 0.0, %v479
      %v481 = vpop.f32.mrb[0].mxu0
      %v482 = vadd.f32 0.0, %v481
      %v483 = vpop.f32.mrb[0].mxu0
      %v484 = vadd.f32 0.0, %v483
      %485 = vmatprep.mubr.bf16.mxu0 0
      %486 = vmatmul.mubr.bf16.gmra.mrb[0].mxu0 %v385
      %v487 = vpop.f32.mrb[0].mxu0
      %v488 = vadd.f32 0.0, %v487
      %v489 = vpop.f32.mrb[0].mxu0
      %v490 = vadd.f32 0.0, %v489
      %v491 = vpop.f32.mrb[0].mxu0
      %v492 = vadd.f32 0.0, %v491
      %v493 = vpop.f32.mrb[0].mxu0
      %v494 = vadd.f32 0.0, %v493
      %495 = vmatprep.mubr.bf16.mxu0 0
      %496 = vmatmul.mubr.bf16.gmra.mrb[0].mxu0 %v388
      %v497 = vpop.f32.mrb[0].mxu0
      %v498 = vadd.f32 0.0, %v497
      %v499 = vpop.f32.mrb[0].mxu0
      %v500 = vadd.f32 0.0, %v499
      %v501 = vpop.f32.mrb[0].mxu0
      %v502 = vadd.f32 0.0, %v501
      %v503 = vpop.f32.mrb[0].mxu0
      %v504 = vadd.f32 0.0, %v503
      %505 = vmatprep.mubr.bf16.mxu0 0
      %506 = vmatmul.mubr.bf16.gmra.mrb[0].mxu0 %v391
      %v507 = vpop.f32.mrb[0].mxu0
      %v508 = vadd.f32 0.0, %v507
      %v509 = vpop.f32.mrb[0].mxu0
      %v510 = vadd.f32 0.0, %v509
      %v511 = vpop.f32.mrb[0].mxu0
      %v512 = vadd.f32 0.0, %v511
      %v513 = vpop.f32.mrb[0].mxu0
      %v514 = vadd.f32 0.0, %v513
      %515 = vmatprep.mubr.bf16.mxu0 0
      %516 = vmatmul.mubr.bf16.gmra.mrb[0].mxu0 %v394
      %v517 = vpop.f32.mrb[0].mxu0
      %v518 = vadd.f32 0.0, %v517
      %v519 = vpop.f32.mrb[0].mxu0
      %v520 = vadd.f32 0.0, %v519
      %v521 = vpop.f32.mrb[0].mxu0
      %v522 = vadd.f32 0.0, %v521
      %v523 = vpop.f32.mrb[0].mxu0
      %v524 = vadd.f32 0.0, %v523
      %525 = vmatprep.mubr.bf16.mxu0 0
      %526 = vmatmul.mubr.bf16.gmra.mrb[0].mxu0 %v397
      %v527 = vpop.f32.mrb[0].mxu0
      %v528 = vadd.f32 0.0, %v527
      %v529 = vpop.f32.mrb[0].mxu0
      %v530 = vadd.f32 0.0, %v529
      %v531 = vpop.f32.mrb[0].mxu0
      %v532 = vadd.f32 0.0, %v531
      %v533 = vpop.f32.mrb[0].mxu0
      %v534 = vadd.f32 0.0, %v533
      %535 = vmatprep.mubr.bf16.mxu0 0
      %536 = vmatmul.mubr.bf16.gmra.mrb[0].mxu0 %v400
      %v537 = vpop.f32.mrb[0].mxu0
      %v538 = vadd.f32 0.0, %v537
      %v539 = vpop.f32.mrb[0].mxu0
      %v540 = vadd.f32 0.0, %v539
      %v541 = vpop.f32.mrb[0].mxu0
      %v542 = vadd.f32 0.0, %v541
      %v543 = vpop.f32.mrb[0].mxu0
      %v544 = vadd.f32 0.0, %v543
      %545 = vmatprep.mubr.bf16.mxu0 0
      %546 = vmatmul.mubr.bf16.gmra.mrb[0].mxu0 %v403
      %v547 = vpop.f32.mrb[0].mxu0
      %v548 = vadd.f32 0.0, %v547
      %v549 = vpop.f32.mrb[0].mxu0
      %v550 = vadd.f32 0.0, %v549
      %v551 = vpop.f32.mrb[0].mxu0
      %v552 = vadd.f32 0.0, %v551
      %v553 = vpop.f32.mrb[0].mxu0
      %v554 = vadd.f32 0.0, %v553
      %555 = vmatprep.mubr.bf16.mxu0 0
      %556 = vmatmul.mubr.bf16.gmra.mrb[0].mxu0 %v406
      %v557 = vpop.f32.mrb[0].mxu0
      %v558 = vadd.f32 0.0, %v557
      %v559 = vpop.f32.mrb[0].mxu0
      %v560 = vadd.f32 0.0, %v559
      %v561 = vpop.f32.mrb[0].mxu0
      %v562 = vadd.f32 0.0, %v561
      %v563 = vpop.f32.mrb[0].mxu0
      %v564 = vadd.f32 0.0, %v563
      %565 = vmatprep.mubr.bf16.mxu0 0
      %566 = vmatmul.mubr.bf16.gmra.mrb[0].mxu0 %v409
      %v567 = vpop.f32.mrb[0].mxu0
      %v568 = vadd.f32 0.0, %v567
      %v569 = vpop.f32.mrb[0].mxu0
      %v570 = vadd.f32 0.0, %v569
      %v571 = vpop.f32.mrb[0].mxu0
      %v572 = vadd.f32 0.0, %v571
      %v573 = vpop.f32.mrb[0].mxu0
      %v574 = vadd.f32 0.0, %v573
      %575 = vmatprep.mubr.bf16.mxu0 0
      %576 = vmatmul.mubr.bf16.gmra.mrb[0].mxu0 %v412
      %v577 = vpop.f32.mrb[0].mxu0
      %v578 = vadd.f32 0.0, %v577
      %v579 = vpop.f32.mrb[0].mxu0
      %v580 = vadd.f32 0.0, %v579
      %v581 = vpop.f32.mrb[0].mxu0
      %v582 = vadd.f32 0.0, %v581
      %v583 = vpop.f32.mrb[0].mxu0
      %v584 = vadd.f32 0.0, %v583
      %585 = vmatprep.mubr.bf16.mxu0 0
      %586 = vmatmul.mubr.bf16.gmra.mrb[0].mxu0 %v415
      %v587 = vpop.f32.mrb[0].mxu0
      %v588 = vadd.f32 0.0, %v587
      %v589 = vpop.f32.mrb[0].mxu0
      %v590 = vadd.f32 0.0, %v589
      %v591 = vpop.f32.mrb[0].mxu0
      %v592 = vadd.f32 0.0, %v591
      %v593 = vpop.f32.mrb[0].mxu0
      %v594 = vadd.f32 0.0, %v593
      %595 = vmatprep.mubr.bf16.mxu0 0
      %596 = vmatmul.mubr.bf16.gmra.mrb[0].mxu0 %v418
      %v597 = vpop.f32.mrb[0].mxu0
      %v598 = vadd.f32 0.0, %v597
      %v599 = vpop.f32.mrb[0].mxu0
      %v600 = vadd.f32 0.0, %v599
      %v601 = vpop.f32.mrb[0].mxu0
      %v602 = vadd.f32 0.0, %v601
      %v603 = vpop.f32.mrb[0].mxu0
      %v604 = vadd.f32 0.0, %v603
      %605 = vmatprep.mubr.bf16.mxu0 0
      %606 = vmatmul.mubr.bf16.gmra.mrb[0].mxu0 %v421
      %v607 = vpop.f32.mrb[0].mxu0
      %v608 = vadd.f32 0.0, %v607
      %v609 = vpop.f32.mrb[0].mxu0
      %v610 = vadd.f32 0.0, %v609
      %v611 = vpop.f32.mrb[0].mxu0
      %v612 = vadd.f32 0.0, %v611
      %v613 = vpop.f32.mrb[0].mxu0
      %v614 = vadd.f32 0.0, %v613
      %615 = vmatprep.mubr.bf16.mxu0 0
      %616 = vmatmul.mubr.bf16.gmra.mrb[0].mxu0 %v424
      %v617 = vpop.f32.mrb[0].mxu0
      %v618 = vadd.f32 0.0, %v617
      %v619 = vpop.f32.mrb[0].mxu0
      %v620 = vadd.f32 0.0, %v619
      %v621 = vpop.f32.mrb[0].mxu0
      %v622 = vadd.f32 0.0, %v621
      %v623 = vpop.f32.mrb[0].mxu0
      %v624 = vadd.f32 0.0, %v623
      %625 = vdwg.mxu0
      %v626 = vld [vmem:[%s2] sm:$0xff]
      %v627 = vld [vmem:[%s2 + $0x8] sm:$0xff]
      %v628 = vld [vmem:[%s2 + $0x10] sm:$0xff]
      %v629 = vld [vmem:[%s2 + $0x18] sm:$0xff]
      %v630 = vld [vmem:[%s2 + $0x20] sm:$0xff]
      %v631 = vld [vmem:[%s2 + $0x28] sm:$0xff]
      %v632 = vld [vmem:[%s2 + $0x30] sm:$0xff]
      %v633 = vld [vmem:[%s2 + $0x38] sm:$0xff]
      %v634 = vld [vmem:[%s2 + $0x40] sm:$0xff]
      %v635 = vld [vmem:[%s2 + $0x48] sm:$0xff]
      %v636 = vld [vmem:[%s2 + $0x50] sm:$0xff]
      %v637 = vld [vmem:[%s2 + $0x58] sm:$0xff]
      %v638 = vld [vmem:[%s2 + $0x60] sm:$0xff]
      %v639 = vld [vmem:[%s2 + $0x68] sm:$0xff]
      %v640 = vld [vmem:[%s2 + $0x70] sm:$0xff]
      %v641 = vld [vmem:[%s2 + $0x78] sm:$0xff]
      %v642 = vld [vmem:[%s2 + $0x80] sm:$0xff]
      %v643 = vld [vmem:[%s2 + $0x88] sm:$0xff]
      %v644 = vld [vmem:[%s2 + $0x90] sm:$0xff]
      %v645 = vld [vmem:[%s2 + $0x98] sm:$0xff]
      %v646 = vld [vmem:[%s2 + $0xa0] sm:$0xff]
      %v647 = vld [vmem:[%s2 + $0xa8] sm:$0xff]
      %v648 = vld [vmem:[%s2 + $0xb0] sm:$0xff]
      %v649 = vld [vmem:[%s2 + $0xb8] sm:$0xff]
      %v650 = vld [vmem:[%s2 + $0xc0] sm:$0xff]
      %v651 = vld [vmem:[%s2 + $0xc8] sm:$0xff]
      %v652 = vld [vmem:[%s2 + $0xd0] sm:$0xff]
      %v653 = vld [vmem:[%s2 + $0xd8] sm:$0xff]
      %v654 = vld [vmem:[%s2 + $0xe0] sm:$0xff]
      %v655 = vld [vmem:[%s2 + $0xe8] sm:$0xff]
      %v656 = vld [vmem:[%s2 + $0xf0] sm:$0xff]
      %v657 = vld [vmem:[%s2 + $0xf8] sm:$0xff]
      %659 = vset.pattern.permute.xlu0 0
      %660 = vperm.xlu0 %659, %v626
      %v661 = vpop.permute.xlu0 %660
      %664 = vset.pattern.permute.xlu0 0
      %665 = vperm.xlu0 %664, %v627
      %v666 = vpop.permute.xlu0 %665
      %669 = vset.pattern.permute.xlu0 0
      %670 = vperm.xlu0 %669, %v628
      %v671 = vpop.permute.xlu0 %670
      %674 = vset.pattern.permute.xlu0 0
      %675 = vperm.xlu0 %674, %v629
      %v676 = vpop.permute.xlu0 %675
      %679 = vset.pattern.permute.xlu0 0
      %680 = vperm.xlu0 %679, %v630
      %v681 = vpop.permute.xlu0 %680
      %684 = vset.pattern.permute.xlu0 0
      %685 = vperm.xlu0 %684, %v631
      %v686 = vpop.permute.xlu0 %685
      %689 = vset.pattern.permute.xlu0 0
      %690 = vperm.xlu0 %689, %v632
      %v691 = vpop.permute.xlu0 %690
      %694 = vset.pattern.permute.xlu0 0
      %695 = vperm.xlu0 %694, %v633
      %v696 = vpop.permute.xlu0 %695
      %699 = vset.pattern.permute.xlu0 0
      %700 = vperm.xlu0 %699, %v634
      %v701 = vpop.permute.xlu0 %700
      %704 = vset.pattern.permute.xlu0 0
      %705 = vperm.xlu0 %704, %v635
      %v706 = vpop.permute.xlu0 %705
      %709 = vset.pattern.permute.xlu0 0
      %710 = vperm.xlu0 %709, %v636
      %v711 = vpop.permute.xlu0 %710
      %714 = vset.pattern.permute.xlu0 0
      %715 = vperm.xlu0 %714, %v637
      %v716 = vpop.permute.xlu0 %715
      %719 = vset.pattern.permute.xlu0 0
      %720 = vperm.xlu0 %719, %v638
      %v721 = vpop.permute.xlu0 %720
      %724 = vset.pattern.permute.xlu0 0
      %725 = vperm.xlu0 %724, %v639
      %v726 = vpop.permute.xlu0 %725
      %729 = vset.pattern.permute.xlu0 0
      %730 = vperm.xlu0 %729, %v640
      %v731 = vpop.permute.xlu0 %730
      %734 = vset.pattern.permute.xlu0 0
      %735 = vperm.xlu0 %734, %v641
      %v736 = vpop.permute.xlu0 %735
      %739 = vset.pattern.permute.xlu0 0
      %740 = vperm.xlu0 %739, %v642
      %v741 = vpop.permute.xlu0 %740
      %744 = vset.pattern.permute.xlu0 0
      %745 = vperm.xlu0 %744, %v643
      %v746 = vpop.permute.xlu0 %745
      %749 = vset.pattern.permute.xlu0 0
      %750 = vperm.xlu0 %749, %v644
      %v751 = vpop.permute.xlu0 %750
      %754 = vset.pattern.permute.xlu0 0
      %755 = vperm.xlu0 %754, %v645
      %v756 = vpop.permute.xlu0 %755
      %759 = vset.pattern.permute.xlu0 0
      %760 = vperm.xlu0 %759, %v646
      %v761 = vpop.permute.xlu0 %760
      %764 = vset.pattern.permute.xlu0 0
      %765 = vperm.xlu0 %764, %v647
      %v766 = vpop.permute.xlu0 %765
      %769 = vset.pattern.permute.xlu0 0
      %770 = vperm.xlu0 %769, %v648
      %v771 = vpop.permute.xlu0 %770
      %774 = vset.pattern.permute.xlu0 0
      %775 = vperm.xlu0 %774, %v649
      %v776 = vpop.permute.xlu0 %775
      %779 = vset.pattern.permute.xlu0 0
      %780 = vperm.xlu0 %779, %v650
      %v781 = vpop.permute.xlu0 %780
      %784 = vset.pattern.permute.xlu0 0
      %785 = vperm.xlu0 %784, %v651
      %v786 = vpop.permute.xlu0 %785
      %789 = vset.pattern.permute.xlu0 0
      %790 = vperm.xlu0 %789, %v652
      %v791 = vpop.permute.xlu0 %790
      %794 = vset.pattern.permute.xlu0 0
      %795 = vperm.xlu0 %794, %v653
      %v796 = vpop.permute.xlu0 %795
      %799 = vset.pattern.permute.xlu0 0
      %800 = vperm.xlu0 %799, %v654
      %v801 = vpop.permute.xlu0 %800
      %804 = vset.pattern.permute.xlu0 0
      %805 = vperm.xlu0 %804, %v655
      %v806 = vpop.permute.xlu0 %805
      %809 = vset.pattern.permute.xlu0 0
      %810 = vperm.xlu0 %809, %v656
      %v811 = vpop.permute.xlu0 %810
      %814 = vset.pattern.permute.xlu0 0
      %815 = vperm.xlu0 %814, %v657
      %v816 = vpop.permute.xlu0 %815
      %v818 = vmul.f32 %v468, %v661
      %v819 = vmul.f32 %v470, %v661
      %v820 = vmul.f32 %v472, %v666
      %v821 = vmul.f32 %v474, %v666
      %v822 = vmul.f32 %v478, %v671
      %v823 = vmul.f32 %v480, %v671
      %v824 = vmul.f32 %v482, %v676
      %v825 = vmul.f32 %v484, %v676
      %v826 = vmul.f32 %v488, %v681
      %v827 = vmul.f32 %v490, %v681
      %v828 = vmul.f32 %v492, %v686
      %v829 = vmul.f32 %v494, %v686
      %v830 = vmul.f32 %v498, %v691
      %v831 = vmul.f32 %v500, %v691
      %v832 = vmul.f32 %v502, %v696
      %v833 = vmul.f32 %v504, %v696
      %v834 = vmul.f32 %v508, %v701
      %v835 = vmul.f32 %v510, %v701
      %v836 = vmul.f32 %v512, %v706
      %v837 = vmul.f32 %v514, %v706
      %v838 = vmul.f32 %v518, %v711
      %v839 = vmul.f32 %v520, %v711
      %v840 = vmul.f32 %v522, %v716
      %v841 = vmul.f32 %v524, %v716
      %v842 = vmul.f32 %v528, %v721
      %v843 = vmul.f32 %v530, %v721
      %v844 = vmul.f32 %v532, %v726
      %v845 = vmul.f32 %v534, %v726
      %v846 = vmul.f32 %v538, %v731
      %v847 = vmul.f32 %v540, %v731
      %v848 = vmul.f32 %v542, %v736
      %v849 = vmul.f32 %v544, %v736
      %v850 = vmul.f32 %v548, %v741
      %v851 = vmul.f32 %v550, %v741
      %v852 = vmul.f32 %v552, %v746
      %v853 = vmul.f32 %v554, %v746
      %v854 = vmul.f32 %v558, %v751
      %v855 = vmul.f32 %v560, %v751
      %v856 = vmul.f32 %v562, %v756
      %v857 = vmul.f32 %v564, %v756
      %v858 = vmul.f32 %v568, %v761
      %v859 = vmul.f32 %v570, %v761
      %v860 = vmul.f32 %v572, %v766
      %v861 = vmul.f32 %v574, %v766
      %v862 = vmul.f32 %v578, %v771
      %v863 = vmul.f32 %v580, %v771
      %v864 = vmul.f32 %v582, %v776
      %v865 = vmul.f32 %v584, %v776
      %v866 = vmul.f32 %v588, %v781
      %v867 = vmul.f32 %v590, %v781
      %v868 = vmul.f32 %v592, %v786
      %v869 = vmul.f32 %v594, %v786
      %v870 = vmul.f32 %v598, %v791
      %v871 = vmul.f32 %v600, %v791
      %v872 = vmul.f32 %v602, %v796
      %v873 = vmul.f32 %v604, %v796
      %v874 = vmul.f32 %v608, %v801
      %v875 = vmul.f32 %v610, %v801
      %v876 = vmul.f32 %v612, %v806
      %v877 = vmul.f32 %v614, %v806
      %v878 = vmul.f32 %v618, %v811
      %v879 = vmul.f32 %v620, %v811
      %v880 = vmul.f32 %v622, %v816
      %v881 = vmul.f32 %v624, %v816
      %882 = vset.pattern.permute.xlu0 1
      %883 = vperm.xlu0 %882, %v626
      %v884 = vpop.permute.xlu0 %883
      %886 = vset.pattern.permute.xlu0 1
      %887 = vperm.xlu0 %886, %v627
      %v888 = vpop.permute.xlu0 %887
      %890 = vset.pattern.permute.xlu0 1
      %891 = vperm.xlu0 %890, %v628
      %v892 = vpop.permute.xlu0 %891
      %894 = vset.pattern.permute.xlu0 1
      %895 = vperm.xlu0 %894, %v629
      %v896 = vpop.permute.xlu0 %895
      %898 = vset.pattern.permute.xlu0 1
      %899 = vperm.xlu0 %898, %v630
      %v900 = vpop.permute.xlu0 %899
      %902 = vset.pattern.permute.xlu0 1
      %903 = vperm.xlu0 %902, %v631
      %v904 = vpop.permute.xlu0 %903
      %906 = vset.pattern.permute.xlu0 1
      %907 = vperm.xlu0 %906, %v632
      %v908 = vpop.permute.xlu0 %907
      %910 = vset.pattern.permute.xlu0 1
      %911 = vperm.xlu0 %910, %v633
      %v912 = vpop.permute.xlu0 %911
      %914 = vset.pattern.permute.xlu0 1
      %915 = vperm.xlu0 %914, %v634
      %v916 = vpop.permute.xlu0 %915
      %918 = vset.pattern.permute.xlu0 1
      %919 = vperm.xlu0 %918, %v635
      %v920 = vpop.permute.xlu0 %919
      %922 = vset.pattern.permute.xlu0 1
      %923 = vperm.xlu0 %922, %v636
      %v924 = vpop.permute.xlu0 %923
      %926 = vset.pattern.permute.xlu0 1
      %927 = vperm.xlu0 %926, %v637
      %v928 = vpop.permute.xlu0 %927
      %930 = vset.pattern.permute.xlu0 1
      %931 = vperm.xlu0 %930, %v638
      %v932 = vpop.permute.xlu0 %931
      %934 = vset.pattern.permute.xlu0 1
      %935 = vperm.xlu0 %934, %v639
      %v936 = vpop.permute.xlu0 %935
      %938 = vset.pattern.permute.xlu0 1
      %939 = vperm.xlu0 %938, %v640
      %v940 = vpop.permute.xlu0 %939
      %942 = vset.pattern.permute.xlu0 1
      %943 = vperm.xlu0 %942, %v641
      %v944 = vpop.permute.xlu0 %943
      %946 = vset.pattern.permute.xlu0 1
      %947 = vperm.xlu0 %946, %v642
      %v948 = vpop.permute.xlu0 %947
      %950 = vset.pattern.permute.xlu0 1
      %951 = vperm.xlu0 %950, %v643
      %v952 = vpop.permute.xlu0 %951
      %954 = vset.pattern.permute.xlu0 1
      %955 = vperm.xlu0 %954, %v644
      %v956 = vpop.permute.xlu0 %955
      %958 = vset.pattern.permute.xlu0 1
      %959 = vperm.xlu0 %958, %v645
      %v960 = vpop.permute.xlu0 %959
      %962 = vset.pattern.permute.xlu0 1
      %963 = vperm.xlu0 %962, %v646
      %v964 = vpop.permute.xlu0 %963
      %966 = vset.pattern.permute.xlu0 1
      %967 = vperm.xlu0 %966, %v647
      %v968 = vpop.permute.xlu0 %967
      %970 = vset.pattern.permute.xlu0 1
      %971 = vperm.xlu0 %970, %v648
      %v972 = vpop.permute.xlu0 %971
      %974 = vset.pattern.permute.xlu0 1
      %975 = vperm.xlu0 %974, %v649
      %v976 = vpop.permute.xlu0 %975
      %978 = vset.pattern.permute.xlu0 1
      %979 = vperm.xlu0 %978, %v650
      %v980 = vpop.permute.xlu0 %979
      %982 = vset.pattern.permute.xlu0 1
      %983 = vperm.xlu0 %982, %v651
      %v984 = vpop.permute.xlu0 %983
      %986 = vset.pattern.permute.xlu0 1
      %987 = vperm.xlu0 %986, %v652
      %v988 = vpop.permute.xlu0 %987
      %990 = vset.pattern.permute.xlu0 1
      %991 = vperm.xlu0 %990, %v653
      %v992 = vpop.permute.xlu0 %991
      %994 = vset.pattern.permute.xlu0 1
      %995 = vperm.xlu0 %994, %v654
      %v996 = vpop.permute.xlu0 %995
      %998 = vset.pattern.permute.xlu0 1
      %999 = vperm.xlu0 %998, %v655
      %v1000 = vpop.permute.xlu0 %999
      %1002 = vset.pattern.permute.xlu0 1
      %1003 = vperm.xlu0 %1002, %v656
      %v1004 = vpop.permute.xlu0 %1003
      %1006 = vset.pattern.permute.xlu0 1
      %1007 = vperm.xlu0 %1006, %v657
      %v1008 = vpop.permute.xlu0 %1007
      %v1010 = vadd.f32 %v818, %v884
      %v1011 = vadd.f32 %v819, %v884
      %v1012 = vadd.f32 %v820, %v888
      %v1013 = vadd.f32 %v821, %v888
      %v1014 = vadd.f32 %v822, %v892
      %v1015 = vadd.f32 %v823, %v892
      %v1016 = vadd.f32 %v824, %v896
      %v1017 = vadd.f32 %v825, %v896
      %v1018 = vadd.f32 %v826, %v900
      %v1019 = vadd.f32 %v827, %v900
      %v1020 = vadd.f32 %v828, %v904
      %v1021 = vadd.f32 %v829, %v904
      %v1022 = vadd.f32 %v830, %v908
      %v1023 = vadd.f32 %v831, %v908
      %v1024 = vadd.f32 %v832, %v912
      %v1025 = vadd.f32 %v833, %v912
      %v1026 = vadd.f32 %v834, %v916
      %v1027 = vadd.f32 %v835, %v916
      %v1028 = vadd.f32 %v836, %v920
      %v1029 = vadd.f32 %v837, %v920
      %v1030 = vadd.f32 %v838, %v924
      %v1031 = vadd.f32 %v839, %v924
      %v1032 = vadd.f32 %v840, %v928
      %v1033 = vadd.f32 %v841, %v928
      %v1034 = vadd.f32 %v842, %v932
      %v1035 = vadd.f32 %v843, %v932
      %v1036 = vadd.f32 %v844, %v936
      %v1037 = vadd.f32 %v845, %v936
      %v1038 = vadd.f32 %v846, %v940
      %v1039 = vadd.f32 %v847, %v940
      %v1040 = vadd.f32 %v848, %v944
      %v1041 = vadd.f32 %v849, %v944
      %v1042 = vadd.f32 %v850, %v948
      %v1043 = vadd.f32 %v851, %v948
      %v1044 = vadd.f32 %v852, %v952
      %v1045 = vadd.f32 %v853, %v952
      %v1046 = vadd.f32 %v854, %v956
      %v1047 = vadd.f32 %v855, %v956
      %v1048 = vadd.f32 %v856, %v960
      %v1049 = vadd.f32 %v857, %v960
      %v1050 = vadd.f32 %v858, %v964
      %v1051 = vadd.f32 %v859, %v964
      %v1052 = vadd.f32 %v860, %v968
      %v1053 = vadd.f32 %v861, %v968
      %v1054 = vadd.f32 %v862, %v972
      %v1055 = vadd.f32 %v863, %v972
      %v1056 = vadd.f32 %v864, %v976
      %v1057 = vadd.f32 %v865, %v976
      %v1058 = vadd.f32 %v866, %v980
      %v1059 = vadd.f32 %v867, %v980
      %v1060 = vadd.f32 %v868, %v984
      %v1061 = vadd.f32 %v869, %v984
      %v1062 = vadd.f32 %v870, %v988
      %v1063 = vadd.f32 %v871, %v988
      %v1064 = vadd.f32 %v872, %v992
      %v1065 = vadd.f32 %v873, %v992
      %v1066 = vadd.f32 %v874, %v996
      %v1067 = vadd.f32 %v875, %v996
      %v1068 = vadd.f32 %v876, %v1000
      %v1069 = vadd.f32 %v877, %v1000
      %v1070 = vadd.f32 %v878, %v1004
      %v1071 = vadd.f32 %v879, %v1004
      %v1072 = vadd.f32 %v880, %v1008
      %v1073 = vadd.f32 %v881, %v1008
      %v1074 = vmax.f32 %v1010, 0.0
      %v1075 = vmax.f32 %v1011, 0.0
      %v1076 = vmax.f32 %v1012, 0.0
      %v1077 = vmax.f32 %v1013, 0.0
      %v1078 = vmax.f32 %v1014, 0.0
      %v1079 = vmax.f32 %v1015, 0.0
      %v1080 = vmax.f32 %v1016, 0.0
      %v1081 = vmax.f32 %v1017, 0.0
      %v1082 = vmax.f32 %v1018, 0.0
      %v1083 = vmax.f32 %v1019, 0.0
      %v1084 = vmax.f32 %v1020, 0.0
      %v1085 = vmax.f32 %v1021, 0.0
      %v1086 = vmax.f32 %v1022, 0.0
      %v1087 = vmax.f32 %v1023, 0.0
      %v1088 = vmax.f32 %v1024, 0.0
      %v1089 = vmax.f32 %v1025, 0.0
      %v1090 = vmax.f32 %v1026, 0.0
      %v1091 = vmax.f32 %v1027, 0.0
      %v1092 = vmax.f32 %v1028, 0.0
      %v1093 = vmax.f32 %v1029, 0.0
      %v1094 = vmax.f32 %v1030, 0.0
      %v1095 = vmax.f32 %v1031, 0.0
      %v1096 = vmax.f32 %v1032, 0.0
      %v1097 = vmax.f32 %v1033, 0.0
      %v1098 = vmax.f32 %v1034, 0.0
      %v1099 = vmax.f32 %v1035, 0.0
      %v1100 = vmax.f32 %v1036, 0.0
      %v1101 = vmax.f32 %v1037, 0.0
      %v1102 = vmax.f32 %v1038, 0.0
      %v1103 = vmax.f32 %v1039, 0.0
      %v1104 = vmax.f32 %v1040, 0.0
      %v1105 = vmax.f32 %v1041, 0.0
      %v1106 = vmax.f32 %v1042, 0.0
      %v1107 = vmax.f32 %v1043, 0.0
      %v1108 = vmax.f32 %v1044, 0.0
      %v1109 = vmax.f32 %v1045, 0.0
      %v1110 = vmax.f32 %v1046, 0.0
      %v1111 = vmax.f32 %v1047, 0.0
      %v1112 = vmax.f32 %v1048, 0.0
      %v1113 = vmax.f32 %v1049, 0.0
      %v1114 = vmax.f32 %v1050, 0.0
      %v1115 = vmax.f32 %v1051, 0.0
      %v1116 = vmax.f32 %v1052, 0.0
      %v1117 = vmax.f32 %v1053, 0.0
      %v1118 = vmax.f32 %v1054, 0.0
      %v1119 = vmax.f32 %v1055, 0.0
      %v1120 = vmax.f32 %v1056, 0.0
      %v1121 = vmax.f32 %v1057, 0.0
      %v1122 = vmax.f32 %v1058, 0.0
      %v1123 = vmax.f32 %v1059, 0.0
      %v1124 = vmax.f32 %v1060, 0.0
      %v1125 = vmax.f32 %v1061, 0.0
      %v1126 = vmax.f32 %v1062, 0.0
      %v1127 = vmax.f32 %v1063, 0.0
      %v1128 = vmax.f32 %v1064, 0.0
      %v1129 = vmax.f32 %v1065, 0.0
      %v1130 = vmax.f32 %v1066, 0.0
      %v1131 = vmax.f32 %v1067, 0.0
      %v1132 = vmax.f32 %v1068, 0.0
      %v1133 = vmax.f32 %v1069, 0.0
      %v1134 = vmax.f32 %v1070, 0.0
      %v1135 = vmax.f32 %v1071, 0.0
      %v1136 = vmax.f32 %v1072, 0.0
      %v1137 = vmax.f32 %v1073, 0.0
      %1138 = vst [vmem:[%s208] sm:$0xff] %v1074
      %1139 = vst [vmem:[%s208 + $0x8] sm:$0xff] %v1075
      %1140 = vst [vmem:[%s208 + $0x10] sm:$0xff] %v1076
      %1141 = vst [vmem:[%s208 + $0x18] sm:$0xff] %v1077
      %1142 = vst [vmem:[%s208 + $0x20] sm:$0xff] %v1078
      %1143 = vst [vmem:[%s208 + $0x28] sm:$0xff] %v1079
      %1144 = vst [vmem:[%s208 + $0x30] sm:$0xff] %v1080
      %1145 = vst [vmem:[%s208 + $0x38] sm:$0xff] %v1081
      %1146 = vst [vmem:[%s208 + $0x40] sm:$0xff] %v1082
      %1147 = vst [vmem:[%s208 + $0x48] sm:$0xff] %v1083
      %1148 = vst [vmem:[%s208 + $0x50] sm:$0xff] %v1084
      %1149 = vst [vmem:[%s208 + $0x58] sm:$0xff] %v1085
      %1150 = vst [vmem:[%s208 + $0x60] sm:$0xff] %v1086
      %1151 = vst [vmem:[%s208 + $0x68] sm:$0xff] %v1087
      %1152 = vst [vmem:[%s208 + $0x70] sm:$0xff] %v1088
      %1153 = vst [vmem:[%s208 + $0x78] sm:$0xff] %v1089
      %1154 = vst [vmem:[%s208 + $0x80] sm:$0xff] %v1090
      %1155 = vst [vmem:[%s208 + $0x88] sm:$0xff] %v1091
      %1156 = vst [vmem:[%s208 + $0x90] sm:$0xff] %v1092
      %1157 = vst [vmem:[%s208 + $0x98] sm:$0xff] %v1093
      %1158 = vst [vmem:[%s208 + $0xa0] sm:$0xff] %v1094
      %1159 = vst [vmem:[%s208 + $0xa8] sm:$0xff] %v1095
      %1160 = vst [vmem:[%s208 + $0xb0] sm:$0xff] %v1096
      %1161 = vst [vmem:[%s208 + $0xb8] sm:$0xff] %v1097
      %1162 = vst [vmem:[%s208 + $0xc0] sm:$0xff] %v1098
      %1163 = vst [vmem:[%s208 + $0xc8] sm:$0xff] %v1099
      %1164 = vst [vmem:[%s208 + $0xd0] sm:$0xff] %v1100
      %1165 = vst [vmem:[%s208 + $0xd8] sm:$0xff] %v1101
      %1166 = vst [vmem:[%s208 + $0xe0] sm:$0xff] %v1102
      %1167 = vst [vmem:[%s208 + $0xe8] sm:$0xff] %v1103
      %1168 = vst [vmem:[%s208 + $0xf0] sm:$0xff] %v1104
      %1169 = vst [vmem:[%s208 + $0xf8] sm:$0xff] %v1105
      %1170 = vst [vmem:[%s208 + $0x100] sm:$0xff] %v1106
      %1171 = vst [vmem:[%s208 + $0x108] sm:$0xff] %v1107
      %1172 = vst [vmem:[%s208 + $0x110] sm:$0xff] %v1108
      %1173 = vst [vmem:[%s208 + $0x118] sm:$0xff] %v1109
      %1174 = vst [vmem:[%s208 + $0x120] sm:$0xff] %v1110
      %1175 = vst [vmem:[%s208 + $0x128] sm:$0xff] %v1111
      %1176 = vst [vmem:[%s208 + $0x130] sm:$0xff] %v1112
      %1177 = vst [vmem:[%s208 + $0x138] sm:$0xff] %v1113
      %1178 = vst [vmem:[%s208 + $0x140] sm:$0xff] %v1114
      %1179 = vst [vmem:[%s208 + $0x148] sm:$0xff] %v1115
      %1180 = vst [vmem:[%s208 + $0x150] sm:$0xff] %v1116
      %1181 = vst [vmem:[%s208 + $0x158] sm:$0xff] %v1117
      %1182 = vst [vmem:[%s208 + $0x160] sm:$0xff] %v1118
      %1183 = vst [vmem:[%s208 + $0x168] sm:$0xff] %v1119
      %1184 = vst [vmem:[%s208 + $0x170] sm:$0xff] %v1120
      %1185 = vst [vmem:[%s208 + $0x178] sm:$0xff] %v1121
      %1186 = vst [vmem:[%s208 + $0x180] sm:$0xff] %v1122
      %1187 = vst [vmem:[%s208 + $0x188] sm:$0xff] %v1123
      %1188 = vst [vmem:[%s208 + $0x190] sm:$0xff] %v1124
      %1189 = vst [vmem:[%s208 + $0x198] sm:$0xff] %v1125
      %1190 = vst [vmem:[%s208 + $0x1a0] sm:$0xff] %v1126
      %1191 = vst [vmem:[%s208 + $0x1a8] sm:$0xff] %v1127
      %1192 = vst [vmem:[%s208 + $0x1b0] sm:$0xff] %v1128
      %1193 = vst [vmem:[%s208 + $0x1b8] sm:$0xff] %v1129
      %1194 = vst [vmem:[%s208 + $0x1c0] sm:$0xff] %v1130
      %1195 = vst [vmem:[%s208 + $0x1c8] sm:$0xff] %v1131
      %1196 = vst [vmem:[%s208 + $0x1d0] sm:$0xff] %v1132
      %1197 = vst [vmem:[%s208 + $0x1d8] sm:$0xff] %v1133
      %1198 = vst [vmem:[%s208 + $0x1e0] sm:$0xff] %v1134
      %1199 = vst [vmem:[%s208 + $0x1e8] sm:$0xff] %v1135
      %1200 = vst [vmem:[%s208 + $0x1f0] sm:$0xff] %v1136
      %1201 = vst [vmem:[%s208 + $0x1f8] sm:$0xff] %v1137
      %s1202 = smul.u32 2, %s19
      %p1203 = scmp.lt.s32.totalorder %s18, 1
      %s1204 = scalar_select %p1203, %s18, 1
      %p1205 = scmp.lt.s32.totalorder %s1202, 1
      %s1206 = scalar_select %p1205, %s1202, 1
      %s1207 = smul.addr %s1204, 64
      %s1208 = sadd.s32 %s1206, %s1207
      %s1209 = smul.addr %s1208, 8
      %s1210 = scalar_lea.vmem %s3, %s1209
      // Predicated region
      $region33: #{fuse_block_forward.3} parent=31 // pred_check
        %p1211 = pneg %p116
      $region34: #{fuse_block_forward.3} parent=31 // pred_check_branch
        %1213 = sbr.rel (%p1211) target = $region36
      $region35: #{fuse_block_forward.3} parent=31 // pred_region
        %s1214 = smul.u32 2, %s19
      $region36: #{fuse_block_forward.3} parent=31 // pred_fallthru
        _
    $region32: #{fuse_block_forward.3} parent=5 // pred_fallthru
      _
    %p1215 = scmp.le.s32.totalorder 2, %s9
    // Predicated region
    $region37: #{fuse_block_forward.3} parent=5 // pred_check
      %p1216 = pneg %p1215
    $region38: #{fuse_block_forward.3} parent=5 // pred_check_branch
      %1218 = sbr.rel (%p1216) target = $region40
    $region39: #{fuse_block_forward.3} parent=5 // pred_region
      %s1219 = ssub.s32 %s9, 2
      // Predicated region
      $region41: #{fuse_block_forward.3} parent=39 // pred_check
        %p1220 = pneg %p122
      $region42: #{fuse_block_forward.3} parent=39 // pred_check_branch
        %1222 = sbr.rel (%p1220) target = $region44
      $region43: #{fuse_block_forward.3} parent=39 // pred_region
        %s1223 = smul.u32 2, %s21
        %p1224 = scmp.lt.s32.totalorder %s20, 1
        %s1225 = scalar_select %p1224, %s20, 1
        %p1226 = scmp.lt.s32.totalorder %s1223, 1
        %s1227 = scalar_select %p1226, %s1223, 1
        %s1228 = smul.addr %s1225, 64
        %s1229 = sadd.s32 %s1227, %s1228
        %s1230 = smul.addr %s1229, 8
        %s1231 = scalar_lea.vmem %s3, %s1230
      $region44: #{fuse_block_forward.3} parent=39 // pred_fallthru
        _
    $region40: #{fuse_block_forward.3} parent=5 // pred_fallthru
      _
  $region6: #{fuse_block_forward.3} parent=0 // loop_footer
    %s13 = sadd.s32 1, %s9
  $region7: #{fuse_block_forward.3} parent=0 // loop_footer_branch
    %8 = sbr.rel target = $region3
  $region8: #{fuse_block_forward.3} parent=0 // loop_exit
    _

</llo_original>
